<compile_context>
chip_gen: v5e
topology: v5e:2x2
jax: 0.10.0
libtpu: 0.0.40
codegen_flags: <defaults>
</compile_context>

<pallas_src>
import functools

import jax
import jax.numpy as jnp
from jax import lax
from jax.experimental import pallas as pl
from jax.experimental.pallas import tpu as pltpu

EPS = 1e-5
LANE = 128


def _round_up(x, m):
    return (x + m - 1) // m * m


def _bn_relu_train(h, gamma, beta):
    """BatchNorm (training mode: batch stats over rows, biased var) + ReLU."""
    mu = jnp.mean(h, axis=0, keepdims=True)
    var = jnp.mean((h - mu) ** 2, axis=0, keepdims=True)
    hn = (h - mu) * lax.rsqrt(var + EPS)
    return jnp.maximum(gamma * hn + beta, 0.0)


# ---------------------------------------------------------------------------
# Kernel
# ---------------------------------------------------------------------------
def merge_kernel(cfg, xyz_ref, slab_ref, out_ref):
    """Single gridless invocation (everything fits VMEM at these shapes).

    xyz_ref : (B, N, 3)  f32  point coordinates
    slab_ref: (R, 128)   f32  packed parameters (static row offsets in `cfg`)
    out_ref : (B, 128)   f32  lane-dense output slab:
                                cols [0, out_dim)           -> new_points
                                cols [xyz_col, xyz_col + 3) -> new_xyz
    """
    xyz = xyz_ref[...]
    B, N, _ = xyz.shape
    x = xyz.reshape(B * N, 3)                 # leading-dim collapse only

    def mlp_chain(h, layers):
        # Conv2d(1x1) -> BatchNorm2d(train) -> ReLU as (B*N, Cin) @ (Cin, Cout).
        # Conv bias omitted: train-mode BN is shift-invariant per channel.
        for (w_off, cin, cout, g_off, be_off) in layers:
            w = slab_ref[w_off:w_off + cin, 0:cout]
            h = jnp.dot(h, w, preferred_element_type=jnp.float32)
            h = _bn_relu_train(h,
                               slab_ref[g_off:g_off + 1, 0:cout],
                               slab_ref[be_off:be_off + 1, 0:cout])
        return h

    points = mlp_chain(x, cfg["mlp"])         # (B*N, C_last)  main MLP
    wf = mlp_chain(x, cfg["wn"])              # (B*N, Wc)      WeightNet
    c_last = points.shape[-1]
    wc = wf.shape[-1]
    out_dim = cfg["out_dim"]

    # pooled[b, w, c] = sum_n wf[b, n, w] * points[b, n, c]
    # explicit batched dot_general: batch dim 0, contraction dim 1.
    pooled = lax.dot_general(
        wf.reshape(B, N, wc), points.reshape(B, N, c_last),
        dimension_numbers=(((1,), (1,)), ((0,), (0,))),
        preferred_element_type=jnp.float32)   # (B, Wc, C_last)

    # nn.Linear(Wc * C_last, out) on the PyTorch-flattened (k = c*Wc + w) vector,
    # evaluated as Wc independent (B, C) @ (C, out) matmuls accumulated with a
    # binary tree so the MXU pushes pipeline (chain depth log2(Wc), not Wc).
    # Linear bias omitted: cancelled exactly by the train-mode BatchNorm1d below.
    lw = cfg["lin_w_off"]
    partials = [
        jnp.dot(pooled[:, w_i, :],
                slab_ref[lw + w_i * c_last: lw + (w_i + 1) * c_last, 0:out_dim],
                preferred_element_type=jnp.float32)
        for w_i in range(wc)
    ]
    while len(partials) > 1:
        nxt = [partials[i] + partials[i + 1] for i in range(0, len(partials) - 1, 2)]
        if len(partials) % 2:
            nxt.append(partials[-1])
        partials = nxt
    z = partials[0]                            # (B, out_dim)

    # BatchNorm1d (training mode, over the B samples) + ReLU
    z = _bn_relu_train(z,
                       slab_ref[cfg["bn_g_off"]:cfg["bn_g_off"] + 1, 0:out_dim],
                       slab_ref[cfg["bn_b_off"]:cfg["bn_b_off"] + 1, 0:out_dim])

    new_xyz = jnp.mean(xyz, axis=1)            # (B, 3)

    # Lane-dense output: place z at cols [0, out_dim) and new_xyz at
    # [xyz_col, xyz_col+3) via two tiny constant placement matmuls, then one
    # unmasked (B, 128) store (single output DMA, no vst.msk partial stores).
    xyz_col = cfg["xyz_col"]
    r_p = lax.broadcasted_iota(jnp.int32, (out_dim, LANE), 0)
    c_p = lax.broadcasted_iota(jnp.int32, (out_dim, LANE), 1)
    e_pts = jnp.where(c_p == r_p, 1.0, 0.0).astype(jnp.float32)
    r_x = lax.broadcasted_iota(jnp.int32, (3, LANE), 0)
    c_x = lax.broadcasted_iota(jnp.int32, (3, LANE), 1)
    e_xyz = jnp.where(c_x == r_x + xyz_col, 1.0, 0.0).astype(jnp.float32)

    out_ref[...] = (jnp.dot(z, e_pts, preferred_element_type=jnp.float32)
                    + jnp.dot(new_xyz, e_xyz, preferred_element_type=jnp.float32))


# ---------------------------------------------------------------------------
# Parameters: synthetic init (module-shaped) + packing into a single slab
# ---------------------------------------------------------------------------
def init_merge_params(key, in_channel=3, mlp=(16, 32), weight_channel=16,
                      hidden=(4, 8)):
    """Deterministic synthetic parameters matching Merge.__init__ shapes."""
    def conv_bn(k, cin, cout):
        kw, kb = jax.random.split(k)
        w = 0.2 * jax.random.normal(kw, (cin, cout), jnp.float32)   # Conv2d weight^T
        b = 0.05 * jax.random.normal(kb, (1, cout), jnp.float32)    # Conv2d bias
        g = jnp.ones((1, cout), jnp.float32)                        # BN gamma
        be = jnp.zeros((1, cout), jnp.float32)                      # BN beta
        return [w, b, g, be]

    n_layers = len(mlp) + (len(hidden) + 1) + 1
    keys = jax.random.split(key, n_layers)
    params = []
    ki = 0
    last = in_channel
    for c in mlp:
        params += conv_bn(keys[ki], last, c); ki += 1; last = c
    wn_dims = [3] + list(hidden) + [weight_channel]
    for i in range(len(wn_dims) - 1):
        params += conv_bn(keys[ki], wn_dims[i], wn_dims[i + 1]); ki += 1

    out_c = mlp[-1]
    lin_in = weight_channel * out_c
    kw, kb = jax.random.split(keys[ki])
    lin_w = 0.05 * jax.random.normal(kw, (lin_in, out_c), jnp.float32)  # (in, out), row k = c*Wc + w
    # re-layout rows (k = c*Wc + w) -> (w, c, out): pure glue, done in JAX.
    lin_w_r = lin_w.reshape(out_c, weight_channel, out_c).transpose(1, 0, 2)
    lin_b = 0.05 * jax.random.normal(kb, (1, out_c), jnp.float32)
    params += [lin_w_r, lin_b,
               jnp.ones((1, out_c), jnp.float32),
               jnp.zeros((1, out_c), jnp.float32)]
    return params


def pack_merge_params(params, in_channel=3, mlp=(16, 32), weight_channel=16,
                      hidden=(4, 8)):
    """Pack all parameters into one (rows, 128) f32 slab (single DMA) plus a
    static layout dict for the kernel.  Conv/Linear biases are skipped: they
    are exactly cancelled by the training-mode BatchNorm that follows them."""
    entries = []          # (row_offset, 2-D array)
    cur = 0

    def add(arr):
        nonlocal cur
        arr = jnp.asarray(arr, jnp.float32)
        off = cur
        entries.append((off, arr))
        cur += _round_up(arr.shape[0], 8)      # keep every block 8-row aligned
        return off

    idx = 0
    mlp_layout = []
    last = in_channel
    for c in mlp:
        w, _b, g, be = params[idx:idx + 4]; idx += 4
        mlp_layout.append((add(w), last, c, add(g), add(be)))
        last = c

    wn_layout = []
    wn_dims = [3] + list(hidden) + [weight_channel]
    for i in range(len(wn_dims) - 1):
        w, _b, g, be = params[idx:idx + 4]; idx += 4
        wn_layout.append((add(w), wn_dims[i], wn_dims[i + 1], add(g), add(be)))

    lin_w_r, _lin_b, bng, bnb = params[idx:idx + 4]
    out_dim = mlp[-1]
    # (Wc, C_last, out) -> (Wc*C_last, out), row = w*C_last + c (leading collapse)
    lin2d = lin_w_r.reshape(weight_channel * out_dim, out_dim)
    lin_w_off = add(lin2d)
    bn_g_off = add(bng)
    bn_b_off = add(bnb)

    slab = jnp.zeros((cur, LANE), jnp.float32)
    for off, arr in entries:
        slab = slab.at[off:off + arr.shape[0], 0:arr.shape[1]].set(arr)

    xyz_col = LANE - 8
    assert out_dim <= xyz_col
    cfg = dict(mlp=tuple(mlp_layout), wn=tuple(wn_layout),
               lin_w_off=lin_w_off, bn_g_off=bn_g_off, bn_b_off=bn_b_off,
               out_dim=out_dim, wc=weight_channel, xyz_col=xyz_col)
    return slab, cfg


# ---------------------------------------------------------------------------
# Wrapper
# ---------------------------------------------------------------------------
def merge_forward(xyz_full, slab, cfg):
    """Glue: slice coordinates, run the kernel once, split the dense output."""
    xyz = xyz_full[:, :, 0:3].astype(jnp.float32)   # normals (cols 3:) unused
    B, _N, _ = xyz.shape
    out_dim = cfg["out_dim"]

    out = pl.pallas_call(
        functools.partial(merge_kernel, cfg),
        out_shape=jax.ShapeDtypeStruct((B, LANE), jnp.float32),
        in_specs=[pl.BlockSpec(memory_space=pltpu.MemorySpace.VMEM),
                  pl.BlockSpec(memory_space=pltpu.MemorySpace.VMEM)],
        out_specs=pl.BlockSpec(memory_space=pltpu.MemorySpace.VMEM),
    )(xyz, slab)

    new_points = out[:, 0:out_dim].reshape(B, 1, out_dim)
    new_xyz = out[:, cfg["xyz_col"]:cfg["xyz_col"] + 3].reshape(B, 1, 3)
    return new_xyz, new_points


# ---------------------------------------------------------------------------
# Pure-JAX reference (faithful to the PyTorch forward, incl. the biases, which
# cancel exactly under training-mode BatchNorm)
# ---------------------------------------------------------------------------
def merge_reference(xyz_full, params, mlp=(16, 32), weight_channel=16,
                    hidden=(4, 8)):
    hp = lax.Precision.HIGHEST
    xyz = xyz_full[:, :, 0:3].astype(jnp.float32)
    B, N, _ = xyz.shape
    x = xyz.reshape(B * N, 3)

    def bn_relu(h, g, be):
        mu = h.mean(0, keepdims=True)
        var = ((h - mu) ** 2).mean(0, keepdims=True)
        return jnp.maximum(g * (h - mu) / jnp.sqrt(var + EPS) + be, 0.0)

    idx = 0
    h = x
    for _ in range(len(mlp)):
        w, b, g, be = params[idx:idx + 4]; idx += 4
        h = bn_relu(jnp.dot(h, w, precision=hp) + b, g, be)
    points = h
    wf = x
    for _ in range(len(hidden) + 1):
        w, b, g, be = params[idx:idx + 4]; idx += 4
        wf = bn_relu(jnp.dot(wf, w, precision=hp) + b, g, be)

    lin_w_r, lin_b, bng, bnb = params[idx:idx + 4]
    c_last = points.shape[-1]
    wc = wf.shape[-1]
    # PyTorch: matmul(points (B,1,C,N), weights (B,1,N,Wc)).view(B,1,C*Wc), k=c*Wc+w
    pooled = jnp.einsum('bnc,bnw->bcw', points.reshape(B, N, c_last),
                        wf.reshape(B, N, wc), precision=hp)
    flat = pooled.reshape(B, c_last * wc)
    lin_w = lin_w_r.transpose(1, 0, 2).reshape(c_last * wc, -1)  # row k = c*Wc + w
    z = jnp.dot(flat, lin_w, precision=hp) + lin_b
    z = bn_relu(z, bng, bnb)
    new_xyz = xyz.mean(axis=1, keepdims=True)
    return new_xyz, z.reshape(B, 1, -1)


if __name__ == "__main__":
    key = jax.random.PRNGKey(0)
    k_data, k_params = jax.random.split(key)

    B, N = 2, 16
    mlp = (16, 32)          # Merge(npoint=1, in_channel=3, mlp=[16, 32])
    hidden = (4, 8)         # WeightNet hidden_unit
    weight_channel = 16

    # xyz input: (B, N, 6) = 3 coords + 3 (unused, normal=False) normal columns
    xyz_full = jax.random.normal(k_data, (B, N, 6), dtype=jnp.float32)
    params = init_merge_params(k_params, in_channel=3, mlp=mlp,
                               weight_channel=weight_channel, hidden=hidden)
    slab, cfg = pack_merge_params(params, in_channel=3, mlp=mlp,
                                  weight_channel=weight_channel, hidden=hidden)

    new_xyz, new_points = merge_forward(xyz_full, slab, cfg)
    jax.block_until_ready((new_xyz, new_points))

    assert new_xyz.shape == (B, 1, 3)
    assert new_points.shape == (B, 1, mlp[-1])

    # Numerical sanity vs. a pure-JAX reference of the PyTorch forward.
    # Loose tolerance on new_points: the final BN normalizes over only B=2
    # samples, which amplifies harmless fp reassociation differences.
    ref_xyz, ref_points = merge_reference(xyz_full, params, mlp=mlp,
                                          weight_channel=weight_channel,
                                          hidden=hidden)
    assert jnp.allclose(new_xyz, ref_xyz, atol=1e-4, rtol=1e-4)
    assert jnp.allclose(new_points, ref_points, atol=5e-2, rtol=5e-2)

    # TODO(synk): BatchNorm running-stat updates (a training-mode side effect)
    # are not reproduced; only the normalized forward value is computed.
    # TODO(synk): at real point-cloud sizes (N in the thousands) this should be
    # re-tiled with a grid over B/N (parallel axis for v7x's 2 TensorCores), an
    # explicit vmem_limit_bytes, and two-pass *global* BatchNorm statistics.
    print("KERNEL_OK")
</pallas_src>

<mosaic_0001>
module attributes {stable_mosaic.version = 11 : i64} {
  func.func @merge_kernel(%arg0: memref<2x16x3xf32, #tpu.memory_space<vmem>>, %arg1: memref<656x128xf32, #tpu.memory_space<vmem>>, %arg2: memref<2x128xf32, #tpu.memory_space<vmem>>) attributes {dimension_semantics = [], scalar_prefetch = 0 : i64, scratch_operands = 0 : i64, tpu.core_type = #tpu.core_type<tc>} {
    %c0 = arith.constant 0 : index
    %c0_0 = arith.constant 0 : index
    %c0_1 = arith.constant 0 : index
    %0 = vector.load %arg0[%c0, %c0_0, %c0_1] : memref<2x16x3xf32, #tpu.memory_space<vmem>>, vector<2x16x3xf32>
    %1 = vector.shape_cast %0 : vector<2x16x3xf32> to vector<32x3xf32>
    %c0_2 = arith.constant 0 : index
    %c0_3 = arith.constant 0 : index
    %2 = vector.load %arg1[%c0_2, %c0_3] : memref<656x128xf32, #tpu.memory_space<vmem>>, vector<3x16xf32>
    %cst = arith.constant dense<0.000000e+00> : vector<32x16xf32>
    %3 = tpu.matmul %1, %2, %cst {dimension_numbers = #tpu.dot_dimension_numbers<[1], [0], [0], [1], [0, 0, 1, 1], [], []>} : vector<32x3xf32>, vector<3x16xf32>, vector<32x16xf32> -> vector<32x16xf32>
    %c8 = arith.constant 8 : index
    %c0_4 = arith.constant 0 : index
    %4 = vector.load %arg1[%c8, %c0_4] : memref<656x128xf32, #tpu.memory_space<vmem>>, vector<1x16xf32>
    %c16 = arith.constant 16 : index
    %c0_5 = arith.constant 0 : index
    %5 = vector.load %arg1[%c16, %c0_5] : memref<656x128xf32, #tpu.memory_space<vmem>>, vector<1x16xf32>
    %cst_6 = arith.constant dense<0.000000e+00> : vector<16xf32>
    %6 = vector.multi_reduction <add>, %3, %cst_6 [0] : vector<32x16xf32> to vector<16xf32>
    %7 = vector.shape_cast %6 : vector<16xf32> to vector<1x16xf32>
    %cst_7 = arith.constant 3.200000e+01 : f32
    %8 = vector.broadcast %cst_7 : f32 to vector<1x16xf32>
    %9 = arith.divf %7, %8 : vector<1x16xf32>
    %10 = vector.broadcast %9 : vector<1x16xf32> to vector<32x16xf32>
    %11 = arith.subf %3, %10 : vector<32x16xf32>
    %12 = arith.mulf %11, %11 : vector<32x16xf32>
    %cst_8 = arith.constant dense<0.000000e+00> : vector<16xf32>
    %13 = vector.multi_reduction <add>, %12, %cst_8 [0] : vector<32x16xf32> to vector<16xf32>
    %14 = vector.shape_cast %13 : vector<16xf32> to vector<1x16xf32>
    %cst_9 = arith.constant 3.200000e+01 : f32
    %15 = vector.broadcast %cst_9 : f32 to vector<1x16xf32>
    %16 = arith.divf %14, %15 : vector<1x16xf32>
    %17 = vector.broadcast %9 : vector<1x16xf32> to vector<32x16xf32>
    %18 = arith.subf %3, %17 : vector<32x16xf32>
    %cst_10 = arith.constant 9.99999974E-6 : f32
    %19 = vector.broadcast %cst_10 : f32 to vector<1x16xf32>
    %20 = arith.addf %16, %19 : vector<1x16xf32>
    %21 = math.rsqrt %20 : vector<1x16xf32>
    %22 = vector.broadcast %21 : vector<1x16xf32> to vector<32x16xf32>
    %23 = arith.mulf %18, %22 : vector<32x16xf32>
    %24 = vector.broadcast %4 : vector<1x16xf32> to vector<32x16xf32>
    %25 = arith.mulf %24, %23 : vector<32x16xf32>
    %26 = vector.broadcast %5 : vector<1x16xf32> to vector<32x16xf32>
    %27 = arith.addf %25, %26 : vector<32x16xf32>
    %cst_11 = arith.constant 0.000000e+00 : f32
    %28 = vector.broadcast %cst_11 : f32 to vector<32x16xf32>
    %29 = arith.maximumf %27, %28 : vector<32x16xf32>
    %c24 = arith.constant 24 : index
    %c0_12 = arith.constant 0 : index
    %30 = vector.load %arg1[%c24, %c0_12] : memref<656x128xf32, #tpu.memory_space<vmem>>, vector<16x32xf32>
    %cst_13 = arith.constant dense<0.000000e+00> : vector<32x32xf32>
    %31 = tpu.matmul %29, %30, %cst_13 {dimension_numbers = #tpu.dot_dimension_numbers<[1], [0], [0], [1], [0, 0, 1, 1], [], []>} : vector<32x16xf32>, vector<16x32xf32>, vector<32x32xf32> -> vector<32x32xf32>
    %c40 = arith.constant 40 : index
    %c0_14 = arith.constant 0 : index
    %32 = vector.load %arg1[%c40, %c0_14] : memref<656x128xf32, #tpu.memory_space<vmem>>, vector<1x32xf32>
    %c48 = arith.constant 48 : index
    %c0_15 = arith.constant 0 : index
    %33 = vector.load %arg1[%c48, %c0_15] : memref<656x128xf32, #tpu.memory_space<vmem>>, vector<1x32xf32>
    %cst_16 = arith.constant dense<0.000000e+00> : vector<32xf32>
    %34 = vector.multi_reduction <add>, %31, %cst_16 [0] : vector<32x32xf32> to vector<32xf32>
    %35 = vector.shape_cast %34 : vector<32xf32> to vector<1x32xf32>
    %cst_17 = arith.constant 3.200000e+01 : f32
    %36 = vector.broadcast %cst_17 : f32 to vector<1x32xf32>
    %37 = arith.divf %35, %36 : vector<1x32xf32>
    %38 = vector.broadcast %37 : vector<1x32xf32> to vector<32x32xf32>
    %39 = arith.subf %31, %38 : vector<32x32xf32>
    %40 = arith.mulf %39, %39 : vector<32x32xf32>
    %cst_18 = arith.constant dense<0.000000e+00> : vector<32xf32>
    %41 = vector.multi_reduction <add>, %40, %cst_18 [0] : vector<32x32xf32> to vector<32xf32>
    %42 = vector.shape_cast %41 : vector<32xf32> to vector<1x32xf32>
    %cst_19 = arith.constant 3.200000e+01 : f32
    %43 = vector.broadcast %cst_19 : f32 to vector<1x32xf32>
    %44 = arith.divf %42, %43 : vector<1x32xf32>
    %45 = vector.broadcast %37 : vector<1x32xf32> to vector<32x32xf32>
    %46 = arith.subf %31, %45 : vector<32x32xf32>
    %cst_20 = arith.constant 9.99999974E-6 : f32
    %47 = vector.broadcast %cst_20 : f32 to vector<1x32xf32>
    %48 = arith.addf %44, %47 : vector<1x32xf32>
    %49 = math.rsqrt %48 : vector<1x32xf32>
    %50 = vector.broadcast %49 : vector<1x32xf32> to vector<32x32xf32>
    %51 = arith.mulf %46, %50 : vector<32x32xf32>
    %52 = vector.broadcast %32 : vector<1x32xf32> to vector<32x32xf32>
    %53 = arith.mulf %52, %51 : vector<32x32xf32>
    %54 = vector.broadcast %33 : vector<1x32xf32> to vector<32x32xf32>
    %55 = arith.addf %53, %54 : vector<32x32xf32>
    %cst_21 = arith.constant 0.000000e+00 : f32
    %56 = vector.broadcast %cst_21 : f32 to vector<32x32xf32>
    %57 = arith.maximumf %55, %56 : vector<32x32xf32>
    %c56 = arith.constant 56 : index
    %c0_22 = arith.constant 0 : index
    %58 = vector.load %arg1[%c56, %c0_22] : memref<656x128xf32, #tpu.memory_space<vmem>>, vector<3x4xf32>
    %cst_23 = arith.constant dense<0.000000e+00> : vector<32x4xf32>
    %59 = tpu.matmul %1, %58, %cst_23 {dimension_numbers = #tpu.dot_dimension_numbers<[1], [0], [0], [1], [0, 0, 1, 1], [], []>} : vector<32x3xf32>, vector<3x4xf32>, vector<32x4xf32> -> vector<32x4xf32>
    %c64 = arith.constant 64 : index
    %c0_24 = arith.constant 0 : index
    %60 = vector.load %arg1[%c64, %c0_24] : memref<656x128xf32, #tpu.memory_space<vmem>>, vector<1x4xf32>
    %c72 = arith.constant 72 : index
    %c0_25 = arith.constant 0 : index
    %61 = vector.load %arg1[%c72, %c0_25] : memref<656x128xf32, #tpu.memory_space<vmem>>, vector<1x4xf32>
    %cst_26 = arith.constant dense<0.000000e+00> : vector<4xf32>
    %62 = vector.multi_reduction <add>, %59, %cst_26 [0] : vector<32x4xf32> to vector<4xf32>
    %63 = vector.shape_cast %62 : vector<4xf32> to vector<1x4xf32>
    %cst_27 = arith.constant 3.200000e+01 : f32
    %64 = vector.broadcast %cst_27 : f32 to vector<1x4xf32>
    %65 = arith.divf %63, %64 : vector<1x4xf32>
    %66 = vector.broadcast %65 : vector<1x4xf32> to vector<32x4xf32>
    %67 = arith.subf %59, %66 : vector<32x4xf32>
    %68 = arith.mulf %67, %67 : vector<32x4xf32>
    %cst_28 = arith.constant dense<0.000000e+00> : vector<4xf32>
    %69 = vector.multi_reduction <add>, %68, %cst_28 [0] : vector<32x4xf32> to vector<4xf32>
    %70 = vector.shape_cast %69 : vector<4xf32> to vector<1x4xf32>
    %cst_29 = arith.constant 3.200000e+01 : f32
    %71 = vector.broadcast %cst_29 : f32 to vector<1x4xf32>
    %72 = arith.divf %70, %71 : vector<1x4xf32>
    %73 = vector.broadcast %65 : vector<1x4xf32> to vector<32x4xf32>
    %74 = arith.subf %59, %73 : vector<32x4xf32>
    %cst_30 = arith.constant 9.99999974E-6 : f32
    %75 = vector.broadcast %cst_30 : f32 to vector<1x4xf32>
    %76 = arith.addf %72, %75 : vector<1x4xf32>
    %77 = math.rsqrt %76 : vector<1x4xf32>
    %78 = vector.broadcast %77 : vector<1x4xf32> to vector<32x4xf32>
    %79 = arith.mulf %74, %78 : vector<32x4xf32>
    %80 = vector.broadcast %60 : vector<1x4xf32> to vector<32x4xf32>
    %81 = arith.mulf %80, %79 : vector<32x4xf32>
    %82 = vector.broadcast %61 : vector<1x4xf32> to vector<32x4xf32>
    %83 = arith.addf %81, %82 : vector<32x4xf32>
    %cst_31 = arith.constant 0.000000e+00 : f32
    %84 = vector.broadcast %cst_31 : f32 to vector<32x4xf32>
    %85 = arith.maximumf %83, %84 : vector<32x4xf32>
    %c80 = arith.constant 80 : index
    %c0_32 = arith.constant 0 : index
    %86 = vector.load %arg1[%c80, %c0_32] : memref<656x128xf32, #tpu.memory_space<vmem>>, vector<4x8xf32>
    %cst_33 = arith.constant dense<0.000000e+00> : vector<32x8xf32>
    %87 = tpu.matmul %85, %86, %cst_33 {dimension_numbers = #tpu.dot_dimension_numbers<[1], [0], [0], [1], [0, 0, 1, 1], [], []>} : vector<32x4xf32>, vector<4x8xf32>, vector<32x8xf32> -> vector<32x8xf32>
    %c88 = arith.constant 88 : index
    %c0_34 = arith.constant 0 : index
    %88 = vector.load %arg1[%c88, %c0_34] : memref<656x128xf32, #tpu.memory_space<vmem>>, vector<1x8xf32>
    %c96 = arith.constant 96 : index
    %c0_35 = arith.constant 0 : index
    %89 = vector.load %arg1[%c96, %c0_35] : memref<656x128xf32, #tpu.memory_space<vmem>>, vector<1x8xf32>
    %cst_36 = arith.constant dense<0.000000e+00> : vector<8xf32>
    %90 = vector.multi_reduction <add>, %87, %cst_36 [0] : vector<32x8xf32> to vector<8xf32>
    %91 = vector.shape_cast %90 : vector<8xf32> to vector<1x8xf32>
    %cst_37 = arith.constant 3.200000e+01 : f32
    %92 = vector.broadcast %cst_37 : f32 to vector<1x8xf32>
    %93 = arith.divf %91, %92 : vector<1x8xf32>
    %94 = vector.broadcast %93 : vector<1x8xf32> to vector<32x8xf32>
    %95 = arith.subf %87, %94 : vector<32x8xf32>
    %96 = arith.mulf %95, %95 : vector<32x8xf32>
    %cst_38 = arith.constant dense<0.000000e+00> : vector<8xf32>
    %97 = vector.multi_reduction <add>, %96, %cst_38 [0] : vector<32x8xf32> to vector<8xf32>
    %98 = vector.shape_cast %97 : vector<8xf32> to vector<1x8xf32>
    %cst_39 = arith.constant 3.200000e+01 : f32
    %99 = vector.broadcast %cst_39 : f32 to vector<1x8xf32>
    %100 = arith.divf %98, %99 : vector<1x8xf32>
    %101 = vector.broadcast %93 : vector<1x8xf32> to vector<32x8xf32>
    %102 = arith.subf %87, %101 : vector<32x8xf32>
    %cst_40 = arith.constant 9.99999974E-6 : f32
    %103 = vector.broadcast %cst_40 : f32 to vector<1x8xf32>
    %104 = arith.addf %100, %103 : vector<1x8xf32>
    %105 = math.rsqrt %104 : vector<1x8xf32>
    %106 = vector.broadcast %105 : vector<1x8xf32> to vector<32x8xf32>
    %107 = arith.mulf %102, %106 : vector<32x8xf32>
    %108 = vector.broadcast %88 : vector<1x8xf32> to vector<32x8xf32>
    %109 = arith.mulf %108, %107 : vector<32x8xf32>
    %110 = vector.broadcast %89 : vector<1x8xf32> to vector<32x8xf32>
    %111 = arith.addf %109, %110 : vector<32x8xf32>
    %cst_41 = arith.constant 0.000000e+00 : f32
    %112 = vector.broadcast %cst_41 : f32 to vector<32x8xf32>
    %113 = arith.maximumf %111, %112 : vector<32x8xf32>
    %c104 = arith.constant 104 : index
    %c0_42 = arith.constant 0 : index
    %114 = vector.load %arg1[%c104, %c0_42] : memref<656x128xf32, #tpu.memory_space<vmem>>, vector<8x16xf32>
    %cst_43 = arith.constant dense<0.000000e+00> : vector<32x16xf32>
    %115 = tpu.matmul %113, %114, %cst_43 {dimension_numbers = #tpu.dot_dimension_numbers<[1], [0], [0], [1], [0, 0, 1, 1], [], []>} : vector<32x8xf32>, vector<8x16xf32>, vector<32x16xf32> -> vector<32x16xf32>
    %c112 = arith.constant 112 : index
    %c0_44 = arith.constant 0 : index
    %116 = vector.load %arg1[%c112, %c0_44] : memref<656x128xf32, #tpu.memory_space<vmem>>, vector<1x16xf32>
    %c120 = arith.constant 120 : index
    %c0_45 = arith.constant 0 : index
    %117 = vector.load %arg1[%c120, %c0_45] : memref<656x128xf32, #tpu.memory_space<vmem>>, vector<1x16xf32>
    %cst_46 = arith.constant dense<0.000000e+00> : vector<16xf32>
    %118 = vector.multi_reduction <add>, %115, %cst_46 [0] : vector<32x16xf32> to vector<16xf32>
    %119 = vector.shape_cast %118 : vector<16xf32> to vector<1x16xf32>
    %cst_47 = arith.constant 3.200000e+01 : f32
    %120 = vector.broadcast %cst_47 : f32 to vector<1x16xf32>
    %121 = arith.divf %119, %120 : vector<1x16xf32>
    %122 = vector.broadcast %121 : vector<1x16xf32> to vector<32x16xf32>
    %123 = arith.subf %115, %122 : vector<32x16xf32>
    %124 = arith.mulf %123, %123 : vector<32x16xf32>
    %cst_48 = arith.constant dense<0.000000e+00> : vector<16xf32>
    %125 = vector.multi_reduction <add>, %124, %cst_48 [0] : vector<32x16xf32> to vector<16xf32>
    %126 = vector.shape_cast %125 : vector<16xf32> to vector<1x16xf32>
    %cst_49 = arith.constant 3.200000e+01 : f32
    %127 = vector.broadcast %cst_49 : f32 to vector<1x16xf32>
    %128 = arith.divf %126, %127 : vector<1x16xf32>
    %129 = vector.broadcast %121 : vector<1x16xf32> to vector<32x16xf32>
    %130 = arith.subf %115, %129 : vector<32x16xf32>
    %cst_50 = arith.constant 9.99999974E-6 : f32
    %131 = vector.broadcast %cst_50 : f32 to vector<1x16xf32>
    %132 = arith.addf %128, %131 : vector<1x16xf32>
    %133 = math.rsqrt %132 : vector<1x16xf32>
    %134 = vector.broadcast %133 : vector<1x16xf32> to vector<32x16xf32>
    %135 = arith.mulf %130, %134 : vector<32x16xf32>
    %136 = vector.broadcast %116 : vector<1x16xf32> to vector<32x16xf32>
    %137 = arith.mulf %136, %135 : vector<32x16xf32>
    %138 = vector.broadcast %117 : vector<1x16xf32> to vector<32x16xf32>
    %139 = arith.addf %137, %138 : vector<32x16xf32>
    %cst_51 = arith.constant 0.000000e+00 : f32
    %140 = vector.broadcast %cst_51 : f32 to vector<32x16xf32>
    %141 = arith.maximumf %139, %140 : vector<32x16xf32>
    %142 = vector.shape_cast %141 : vector<32x16xf32> to vector<2x16x16xf32>
    %143 = vector.shape_cast %57 : vector<32x32xf32> to vector<2x16x32xf32>
    %cst_52 = arith.constant dense<0.000000e+00> : vector<2x16x32xf32>
    %144 = tpu.matmul %142, %143, %cst_52 {dimension_numbers = #tpu.dot_dimension_numbers<[1], [1], [2], [2], [0, 0, 0, 2, 1, 2], [0], [0]>} : vector<2x16x16xf32>, vector<2x16x32xf32>, vector<2x16x32xf32> -> vector<2x16x32xf32>
    %145 = vector.extract_strided_slice %144 {offsets = [0, 0, 0], sizes = [2, 1, 32], strides = [1, 1, 1]} : vector<2x16x32xf32> to vector<2x1x32xf32>
    %146 = vector.shape_cast %145 : vector<2x1x32xf32> to vector<2x32xf32>
    %c128 = arith.constant 128 : index
    %c0_53 = arith.constant 0 : index
    %147 = vector.load %arg1[%c128, %c0_53] : memref<656x128xf32, #tpu.memory_space<vmem>>, vector<32x32xf32>
    %cst_54 = arith.constant dense<0.000000e+00> : vector<2x32xf32>
    %148 = tpu.matmul %146, %147, %cst_54 {dimension_numbers = #tpu.dot_dimension_numbers<[1], [0], [0], [1], [0, 0, 1, 1], [], []>} : vector<2x32xf32>, vector<32x32xf32>, vector<2x32xf32> -> vector<2x32xf32>
    %149 = vector.extract_strided_slice %144 {offsets = [0, 1, 0], sizes = [2, 1, 32], strides = [1, 1, 1]} : vector<2x16x32xf32> to vector<2x1x32xf32>
    %150 = vector.shape_cast %149 : vector<2x1x32xf32> to vector<2x32xf32>
    %c160 = arith.constant 160 : index
    %c0_55 = arith.constant 0 : index
    %151 = vector.load %arg1[%c160, %c0_55] : memref<656x128xf32, #tpu.memory_space<vmem>>, vector<32x32xf32>
    %cst_56 = arith.constant dense<0.000000e+00> : vector<2x32xf32>
    %152 = tpu.matmul %150, %151, %cst_56 {dimension_numbers = #tpu.dot_dimension_numbers<[1], [0], [0], [1], [0, 0, 1, 1], [], []>} : vector<2x32xf32>, vector<32x32xf32>, vector<2x32xf32> -> vector<2x32xf32>
    %153 = vector.extract_strided_slice %144 {offsets = [0, 2, 0], sizes = [2, 1, 32], strides = [1, 1, 1]} : vector<2x16x32xf32> to vector<2x1x32xf32>
    %154 = vector.shape_cast %153 : vector<2x1x32xf32> to vector<2x32xf32>
    %c192 = arith.constant 192 : index
    %c0_57 = arith.constant 0 : index
    %155 = vector.load %arg1[%c192, %c0_57] : memref<656x128xf32, #tpu.memory_space<vmem>>, vector<32x32xf32>
    %cst_58 = arith.constant dense<0.000000e+00> : vector<2x32xf32>
    %156 = tpu.matmul %154, %155, %cst_58 {dimension_numbers = #tpu.dot_dimension_numbers<[1], [0], [0], [1], [0, 0, 1, 1], [], []>} : vector<2x32xf32>, vector<32x32xf32>, vector<2x32xf32> -> vector<2x32xf32>
    %157 = vector.extract_strided_slice %144 {offsets = [0, 3, 0], sizes = [2, 1, 32], strides = [1, 1, 1]} : vector<2x16x32xf32> to vector<2x1x32xf32>
    %158 = vector.shape_cast %157 : vector<2x1x32xf32> to vector<2x32xf32>
    %c224 = arith.constant 224 : index
    %c0_59 = arith.constant 0 : index
    %159 = vector.load %arg1[%c224, %c0_59] : memref<656x128xf32, #tpu.memory_space<vmem>>, vector<32x32xf32>
    %cst_60 = arith.constant dense<0.000000e+00> : vector<2x32xf32>
    %160 = tpu.matmul %158, %159, %cst_60 {dimension_numbers = #tpu.dot_dimension_numbers<[1], [0], [0], [1], [0, 0, 1, 1], [], []>} : vector<2x32xf32>, vector<32x32xf32>, vector<2x32xf32> -> vector<2x32xf32>
    %161 = vector.extract_strided_slice %144 {offsets = [0, 4, 0], sizes = [2, 1, 32], strides = [1, 1, 1]} : vector<2x16x32xf32> to vector<2x1x32xf32>
    %162 = vector.shape_cast %161 : vector<2x1x32xf32> to vector<2x32xf32>
    %c256 = arith.constant 256 : index
    %c0_61 = arith.constant 0 : index
    %163 = vector.load %arg1[%c256, %c0_61] : memref<656x128xf32, #tpu.memory_space<vmem>>, vector<32x32xf32>
    %cst_62 = arith.constant dense<0.000000e+00> : vector<2x32xf32>
    %164 = tpu.matmul %162, %163, %cst_62 {dimension_numbers = #tpu.dot_dimension_numbers<[1], [0], [0], [1], [0, 0, 1, 1], [], []>} : vector<2x32xf32>, vector<32x32xf32>, vector<2x32xf32> -> vector<2x32xf32>
    %165 = vector.extract_strided_slice %144 {offsets = [0, 5, 0], sizes = [2, 1, 32], strides = [1, 1, 1]} : vector<2x16x32xf32> to vector<2x1x32xf32>
    %166 = vector.shape_cast %165 : vector<2x1x32xf32> to vector<2x32xf32>
    %c288 = arith.constant 288 : index
    %c0_63 = arith.constant 0 : index
    %167 = vector.load %arg1[%c288, %c0_63] : memref<656x128xf32, #tpu.memory_space<vmem>>, vector<32x32xf32>
    %cst_64 = arith.constant dense<0.000000e+00> : vector<2x32xf32>
    %168 = tpu.matmul %166, %167, %cst_64 {dimension_numbers = #tpu.dot_dimension_numbers<[1], [0], [0], [1], [0, 0, 1, 1], [], []>} : vector<2x32xf32>, vector<32x32xf32>, vector<2x32xf32> -> vector<2x32xf32>
    %169 = vector.extract_strided_slice %144 {offsets = [0, 6, 0], sizes = [2, 1, 32], strides = [1, 1, 1]} : vector<2x16x32xf32> to vector<2x1x32xf32>
    %170 = vector.shape_cast %169 : vector<2x1x32xf32> to vector<2x32xf32>
    %c320 = arith.constant 320 : index
    %c0_65 = arith.constant 0 : index
    %171 = vector.load %arg1[%c320, %c0_65] : memref<656x128xf32, #tpu.memory_space<vmem>>, vector<32x32xf32>
    %cst_66 = arith.constant dense<0.000000e+00> : vector<2x32xf32>
    %172 = tpu.matmul %170, %171, %cst_66 {dimension_numbers = #tpu.dot_dimension_numbers<[1], [0], [0], [1], [0, 0, 1, 1], [], []>} : vector<2x32xf32>, vector<32x32xf32>, vector<2x32xf32> -> vector<2x32xf32>
    %173 = vector.extract_strided_slice %144 {offsets = [0, 7, 0], sizes = [2, 1, 32], strides = [1, 1, 1]} : vector<2x16x32xf32> to vector<2x1x32xf32>
    %174 = vector.shape_cast %173 : vector<2x1x32xf32> to vector<2x32xf32>
    %c352 = arith.constant 352 : index
    %c0_67 = arith.constant 0 : index
    %175 = vector.load %arg1[%c352, %c0_67] : memref<656x128xf32, #tpu.memory_space<vmem>>, vector<32x32xf32>
    %cst_68 = arith.constant dense<0.000000e+00> : vector<2x32xf32>
    %176 = tpu.matmul %174, %175, %cst_68 {dimension_numbers = #tpu.dot_dimension_numbers<[1], [0], [0], [1], [0, 0, 1, 1], [], []>} : vector<2x32xf32>, vector<32x32xf32>, vector<2x32xf32> -> vector<2x32xf32>
    %177 = vector.extract_strided_slice %144 {offsets = [0, 8, 0], sizes = [2, 1, 32], strides = [1, 1, 1]} : vector<2x16x32xf32> to vector<2x1x32xf32>
    %178 = vector.shape_cast %177 : vector<2x1x32xf32> to vector<2x32xf32>
    %c384 = arith.constant 384 : index
    %c0_69 = arith.constant 0 : index
    %179 = vector.load %arg1[%c384, %c0_69] : memref<656x128xf32, #tpu.memory_space<vmem>>, vector<32x32xf32>
    %cst_70 = arith.constant dense<0.000000e+00> : vector<2x32xf32>
    %180 = tpu.matmul %178, %179, %cst_70 {dimension_numbers = #tpu.dot_dimension_numbers<[1], [0], [0], [1], [0, 0, 1, 1], [], []>} : vector<2x32xf32>, vector<32x32xf32>, vector<2x32xf32> -> vector<2x32xf32>
    %181 = vector.extract_strided_slice %144 {offsets = [0, 9, 0], sizes = [2, 1, 32], strides = [1, 1, 1]} : vector<2x16x32xf32> to vector<2x1x32xf32>
    %182 = vector.shape_cast %181 : vector<2x1x32xf32> to vector<2x32xf32>
    %c416 = arith.constant 416 : index
    %c0_71 = arith.constant 0 : index
    %183 = vector.load %arg1[%c416, %c0_71] : memref<656x128xf32, #tpu.memory_space<vmem>>, vector<32x32xf32>
    %cst_72 = arith.constant dense<0.000000e+00> : vector<2x32xf32>
    %184 = tpu.matmul %182, %183, %cst_72 {dimension_numbers = #tpu.dot_dimension_numbers<[1], [0], [0], [1], [0, 0, 1, 1], [], []>} : vector<2x32xf32>, vector<32x32xf32>, vector<2x32xf32> -> vector<2x32xf32>
    %185 = vector.extract_strided_slice %144 {offsets = [0, 10, 0], sizes = [2, 1, 32], strides = [1, 1, 1]} : vector<2x16x32xf32> to vector<2x1x32xf32>
    %186 = vector.shape_cast %185 : vector<2x1x32xf32> to vector<2x32xf32>
    %c448 = arith.constant 448 : index
    %c0_73 = arith.constant 0 : index
    %187 = vector.load %arg1[%c448, %c0_73] : memref<656x128xf32, #tpu.memory_space<vmem>>, vector<32x32xf32>
    %cst_74 = arith.constant dense<0.000000e+00> : vector<2x32xf32>
    %188 = tpu.matmul %186, %187, %cst_74 {dimension_numbers = #tpu.dot_dimension_numbers<[1], [0], [0], [1], [0, 0, 1, 1], [], []>} : vector<2x32xf32>, vector<32x32xf32>, vector<2x32xf32> -> vector<2x32xf32>
    %189 = vector.extract_strided_slice %144 {offsets = [0, 11, 0], sizes = [2, 1, 32], strides = [1, 1, 1]} : vector<2x16x32xf32> to vector<2x1x32xf32>
    %190 = vector.shape_cast %189 : vector<2x1x32xf32> to vector<2x32xf32>
    %c480 = arith.constant 480 : index
    %c0_75 = arith.constant 0 : index
    %191 = vector.load %arg1[%c480, %c0_75] : memref<656x128xf32, #tpu.memory_space<vmem>>, vector<32x32xf32>
    %cst_76 = arith.constant dense<0.000000e+00> : vector<2x32xf32>
    %192 = tpu.matmul %190, %191, %cst_76 {dimension_numbers = #tpu.dot_dimension_numbers<[1], [0], [0], [1], [0, 0, 1, 1], [], []>} : vector<2x32xf32>, vector<32x32xf32>, vector<2x32xf32> -> vector<2x32xf32>
    %193 = vector.extract_strided_slice %144 {offsets = [0, 12, 0], sizes = [2, 1, 32], strides = [1, 1, 1]} : vector<2x16x32xf32> to vector<2x1x32xf32>
    %194 = vector.shape_cast %193 : vector<2x1x32xf32> to vector<2x32xf32>
    %c512 = arith.constant 512 : index
    %c0_77 = arith.constant 0 : index
    %195 = vector.load %arg1[%c512, %c0_77] : memref<656x128xf32, #tpu.memory_space<vmem>>, vector<32x32xf32>
    %cst_78 = arith.constant dense<0.000000e+00> : vector<2x32xf32>
    %196 = tpu.matmul %194, %195, %cst_78 {dimension_numbers = #tpu.dot_dimension_numbers<[1], [0], [0], [1], [0, 0, 1, 1], [], []>} : vector<2x32xf32>, vector<32x32xf32>, vector<2x32xf32> -> vector<2x32xf32>
    %197 = vector.extract_strided_slice %144 {offsets = [0, 13, 0], sizes = [2, 1, 32], strides = [1, 1, 1]} : vector<2x16x32xf32> to vector<2x1x32xf32>
    %198 = vector.shape_cast %197 : vector<2x1x32xf32> to vector<2x32xf32>
    %c544 = arith.constant 544 : index
    %c0_79 = arith.constant 0 : index
    %199 = vector.load %arg1[%c544, %c0_79] : memref<656x128xf32, #tpu.memory_space<vmem>>, vector<32x32xf32>
    %cst_80 = arith.constant dense<0.000000e+00> : vector<2x32xf32>
    %200 = tpu.matmul %198, %199, %cst_80 {dimension_numbers = #tpu.dot_dimension_numbers<[1], [0], [0], [1], [0, 0, 1, 1], [], []>} : vector<2x32xf32>, vector<32x32xf32>, vector<2x32xf32> -> vector<2x32xf32>
    %201 = vector.extract_strided_slice %144 {offsets = [0, 14, 0], sizes = [2, 1, 32], strides = [1, 1, 1]} : vector<2x16x32xf32> to vector<2x1x32xf32>
    %202 = vector.shape_cast %201 : vector<2x1x32xf32> to vector<2x32xf32>
    %c576 = arith.constant 576 : index
    %c0_81 = arith.constant 0 : index
    %203 = vector.load %arg1[%c576, %c0_81] : memref<656x128xf32, #tpu.memory_space<vmem>>, vector<32x32xf32>
    %cst_82 = arith.constant dense<0.000000e+00> : vector<2x32xf32>
    %204 = tpu.matmul %202, %203, %cst_82 {dimension_numbers = #tpu.dot_dimension_numbers<[1], [0], [0], [1], [0, 0, 1, 1], [], []>} : vector<2x32xf32>, vector<32x32xf32>, vector<2x32xf32> -> vector<2x32xf32>
    %205 = vector.extract_strided_slice %144 {offsets = [0, 15, 0], sizes = [2, 1, 32], strides = [1, 1, 1]} : vector<2x16x32xf32> to vector<2x1x32xf32>
    %206 = vector.shape_cast %205 : vector<2x1x32xf32> to vector<2x32xf32>
    %c608 = arith.constant 608 : index
    %c0_83 = arith.constant 0 : index
    %207 = vector.load %arg1[%c608, %c0_83] : memref<656x128xf32, #tpu.memory_space<vmem>>, vector<32x32xf32>
    %cst_84 = arith.constant dense<0.000000e+00> : vector<2x32xf32>
    %208 = tpu.matmul %206, %207, %cst_84 {dimension_numbers = #tpu.dot_dimension_numbers<[1], [0], [0], [1], [0, 0, 1, 1], [], []>} : vector<2x32xf32>, vector<32x32xf32>, vector<2x32xf32> -> vector<2x32xf32>
    %209 = arith.addf %148, %152 : vector<2x32xf32>
    %210 = arith.addf %156, %160 : vector<2x32xf32>
    %211 = arith.addf %164, %168 : vector<2x32xf32>
    %212 = arith.addf %172, %176 : vector<2x32xf32>
    %213 = arith.addf %180, %184 : vector<2x32xf32>
    %214 = arith.addf %188, %192 : vector<2x32xf32>
    %215 = arith.addf %196, %200 : vector<2x32xf32>
    %216 = arith.addf %204, %208 : vector<2x32xf32>
    %217 = arith.addf %209, %210 : vector<2x32xf32>
    %218 = arith.addf %211, %212 : vector<2x32xf32>
    %219 = arith.addf %213, %214 : vector<2x32xf32>
    %220 = arith.addf %215, %216 : vector<2x32xf32>
    %221 = arith.addf %217, %218 : vector<2x32xf32>
    %222 = arith.addf %219, %220 : vector<2x32xf32>
    %223 = arith.addf %221, %222 : vector<2x32xf32>
    %c640 = arith.constant 640 : index
    %c0_85 = arith.constant 0 : index
    %224 = vector.load %arg1[%c640, %c0_85] : memref<656x128xf32, #tpu.memory_space<vmem>>, vector<1x32xf32>
    %c648 = arith.constant 648 : index
    %c0_86 = arith.constant 0 : index
    %225 = vector.load %arg1[%c648, %c0_86] : memref<656x128xf32, #tpu.memory_space<vmem>>, vector<1x32xf32>
    %cst_87 = arith.constant dense<0.000000e+00> : vector<32xf32>
    %226 = vector.multi_reduction <add>, %223, %cst_87 [0] : vector<2x32xf32> to vector<32xf32>
    %227 = vector.shape_cast %226 : vector<32xf32> to vector<1x32xf32>
    %cst_88 = arith.constant 2.000000e+00 : f32
    %228 = vector.broadcast %cst_88 : f32 to vector<1x32xf32>
    %229 = arith.divf %227, %228 : vector<1x32xf32>
    %230 = vector.broadcast %229 : vector<1x32xf32> to vector<2x32xf32>
    %231 = arith.subf %223, %230 : vector<2x32xf32>
    %232 = arith.mulf %231, %231 : vector<2x32xf32>
    %cst_89 = arith.constant dense<0.000000e+00> : vector<32xf32>
    %233 = vector.multi_reduction <add>, %232, %cst_89 [0] : vector<2x32xf32> to vector<32xf32>
    %234 = vector.shape_cast %233 : vector<32xf32> to vector<1x32xf32>
    %cst_90 = arith.constant 2.000000e+00 : f32
    %235 = vector.broadcast %cst_90 : f32 to vector<1x32xf32>
    %236 = arith.divf %234, %235 : vector<1x32xf32>
    %237 = vector.broadcast %229 : vector<1x32xf32> to vector<2x32xf32>
    %238 = arith.subf %223, %237 : vector<2x32xf32>
    %cst_91 = arith.constant 9.99999974E-6 : f32
    %239 = vector.broadcast %cst_91 : f32 to vector<1x32xf32>
    %240 = arith.addf %236, %239 : vector<1x32xf32>
    %241 = math.rsqrt %240 : vector<1x32xf32>
    %242 = vector.broadcast %241 : vector<1x32xf32> to vector<2x32xf32>
    %243 = arith.mulf %238, %242 : vector<2x32xf32>
    %244 = vector.broadcast %224 : vector<1x32xf32> to vector<2x32xf32>
    %245 = arith.mulf %244, %243 : vector<2x32xf32>
    %246 = vector.broadcast %225 : vector<1x32xf32> to vector<2x32xf32>
    %247 = arith.addf %245, %246 : vector<2x32xf32>
    %cst_92 = arith.constant 0.000000e+00 : f32
    %248 = vector.broadcast %cst_92 : f32 to vector<2x32xf32>
    %249 = arith.maximumf %247, %248 : vector<2x32xf32>
    %cst_93 = arith.constant dense<0.000000e+00> : vector<2x3xf32>
    %250 = vector.multi_reduction <add>, %0, %cst_93 [1] : vector<2x16x3xf32> to vector<2x3xf32>
    %cst_94 = arith.constant 1.600000e+01 : f32
    %251 = vector.broadcast %cst_94 : f32 to vector<2x3xf32>
    %252 = arith.divf %250, %251 : vector<2x3xf32>
    %253 = tpu.iota {dimensions = array<i32: 0>} : vector<32x128xi32>
    %254 = tpu.iota {dimensions = array<i32: 1>} : vector<32x128xi32>
    %255 = arith.cmpi eq, %254, %253 : vector<32x128xi32>
    %cst_95 = arith.constant 1.000000e+00 : f32
    %cst_96 = arith.constant 0.000000e+00 : f32
    %256 = vector.broadcast %cst_95 : f32 to vector<32x128xf32>
    %257 = vector.broadcast %cst_96 : f32 to vector<32x128xf32>
    %258 = arith.select %255, %256, %257 : vector<32x128xi1>, vector<32x128xf32>
    %259 = tpu.iota {dimensions = array<i32: 0>} : vector<3x128xi32>
    %260 = tpu.iota {dimensions = array<i32: 1>} : vector<3x128xi32>
    %c120_i32 = arith.constant 120 : i32
    %261 = vector.broadcast %c120_i32 : i32 to vector<3x128xi32>
    %262 = arith.addi %259, %261 : vector<3x128xi32>
    %263 = arith.cmpi eq, %260, %262 : vector<3x128xi32>
    %cst_97 = arith.constant 1.000000e+00 : f32
    %cst_98 = arith.constant 0.000000e+00 : f32
    %264 = vector.broadcast %cst_97 : f32 to vector<3x128xf32>
    %265 = vector.broadcast %cst_98 : f32 to vector<3x128xf32>
    %266 = arith.select %263, %264, %265 : vector<3x128xi1>, vector<3x128xf32>
    %cst_99 = arith.constant dense<0.000000e+00> : vector<2x128xf32>
    %267 = tpu.matmul %249, %258, %cst_99 {dimension_numbers = #tpu.dot_dimension_numbers<[1], [0], [0], [1], [0, 0, 1, 1], [], []>} : vector<2x32xf32>, vector<32x128xf32>, vector<2x128xf32> -> vector<2x128xf32>
    %cst_100 = arith.constant dense<0.000000e+00> : vector<2x128xf32>
    %268 = tpu.matmul %252, %266, %cst_100 {dimension_numbers = #tpu.dot_dimension_numbers<[1], [0], [0], [1], [0, 0, 1, 1], [], []>} : vector<2x3xf32>, vector<3x128xf32>, vector<2x128xf32> -> vector<2x128xf32>
    %269 = arith.addf %267, %268 : vector<2x128xf32>
    %c0_101 = arith.constant 0 : index
    %c0_102 = arith.constant 0 : index
    %270 = vector.load %arg2[%c0_101, %c0_102] : memref<2x128xf32, #tpu.memory_space<vmem>>, vector<2x128xf32>
    tpu.vector_store %arg2[%c0_101, %c0_102], %269 {strides = array<i32>} : memref<2x128xf32, #tpu.memory_space<vmem>>, vector<2x128xf32>,
    return
  }
}

</mosaic_0001>

<llo_original>
// kernel: tpu_custom_call.1
$region0: #{tpu_custom_call.1}
  #allocation0 [shape = 'u32[]', space=smem, size = 0x4, offset = 0x4, fixed_abs, tag = 'smem constant byte address 0x4 - core index']
  #allocation1 [shape = 'u32[72,128]{1,0:T(1,128)}', space=vmem, size = 0x9000, scoped, tag = 'internal scratch']
  %s0 = inlined_call_operand.vmem [shape: f32[2,16,3], index: 0, kind: input, shape index: {}]
  %s1 = inlined_call_operand.hbm [shape: f32[656,128], index: 1, kind: input, shape index: {}]
  %s2 = inlined_call_operand.hbm [shape: f32[2,128], index: 2, kind: output, shape index: {}]
  %s3 = sld [smem:[#allocation0]]
  $region22: #{tpu_custom_call.1} parent=0
    _
  %s5 = ssub.s32 1, %s3
  %s6 = scalar_select 0, %s5, %s3
  $region1: #{tpu_custom_call.1} parent=0
    #allocation2 [shape = 'u8[335872]{0}', space=vmem, size = 0x52000, scoped, tag = 'input window, operand 1, single buffered']
    #allocation3 [shape = 's32[1]{0}', space=sflag, size = 0x4, scoped, tag = 'scoped memory for tpu_custom_call.1']
    #allocation4 [shape = 's32[1]{0}', space=sflag, size = 0x4, scoped, tag = 'scoped memory for tpu_custom_call.1']
    #allocation5 [shape = 'u8[1024]{0}', space=vmem, size = 0x400, scoped, tag = 'output window, operand 0, single buffered']
    %7 = vsyncpa [#allocation3], 0
    %8 = vsyncpa [#allocation4], 0
    // Predicated region
    $region2: #{tpu_custom_call.1} parent=1 // pred_check
      _
    $region3: #{tpu_custom_call.1} parent=1 // pred_check_branch
      %10 = sbr.rel (0) target = $region5
    $region4: #{tpu_custom_call.1} parent=1 // pred_region
      _
    $region5: #{tpu_custom_call.1} parent=1 // pred_fallthru
      _
    // Predicated region
    $region6: #{tpu_custom_call.1} parent=1 // pred_check
      _
    $region7: #{tpu_custom_call.1} parent=1 // pred_check_branch
      %12 = sbr.rel (0) target = $region9
    $region8: #{tpu_custom_call.1} parent=1 // pred_region
      %14 = vsyncadd [#allocation3], 0
      %s15 = sshll.u32 %s1, 4
      %s16 = int_to_ptr.hbm [resolvable:$true] %s15
      %s17 = sshll.u32 [#allocation2], 4
      %s18 = int_to_ptr.vmem [resolvable:$true] %s17
      %23 = dma.hbm_to_vmem [thread:$0]  %s16, 10496, %s18, [#allocation3], 128, 128, 8
    $region9: #{tpu_custom_call.1} parent=1 // pred_fallthru
      _
    // Predicated region
    $region10: #{tpu_custom_call.1} parent=1 // pred_check
      _
    $region11: #{tpu_custom_call.1} parent=1 // pred_check_branch
      %25 = sbr.rel (0) target = $region13
    $region12: #{tpu_custom_call.1} parent=1 // pred_region
      %27 = dma.done [#allocation3], 10496
    $region13: #{tpu_custom_call.1} parent=1 // pred_fallthru
      _
    %v28 = vld [vmem:[%s0] sm:$0xff]
    %v29 = vld [vmem:[%s0 + $0x8] sm:$0xff]
    %v30 = vld [vmem:[%s0 + $0x10] sm:$0xff]
    %v31 = vld [vmem:[%s0 + $0x18] sm:$0xff]
    %v32 = vld [vmem:[#allocation2] sm:$0x7]
    %vm33 = vcmask 23552
    %v35 = vsel %vm33, %v28, 0
    %v38 = vsel %vm33, %v29, 0
    %v41 = vsel %vm33, %v30, 0
    %v44 = vsel %vm33, %v31, 0
    %vm46 = vcmask 1042432
    %v48 = vsel %vm46, %v32, 0
    %50 = vmatpush.msra.mxu0 0.0
    %51 = vmatpush.msra.mxu0 0.0
    %52 = vmatpush.msra.mxu0 0.0
    %53 = vmatpush.msra.mxu0 0.0
    %54 = vmatpush.msra.mxu0 0.0
    %55 = vmatpush.msra.mxu0 0.0
    %56 = vmatpush.msra.mxu0 0.0
    %57 = vmatpush.msra.mxu0 0.0
    %58 = vmatpush.msra.mxu0 0.0
    %59 = vmatpush.msra.mxu0 0.0
    %60 = vmatpush.msra.mxu0 0.0
    %61 = vmatpush.msra.mxu0 0.0
    %62 = vmatpush.msra.mxu0 0.0
    %63 = vmatpush.msra.mxu0 0.0
    %64 = vmatpush.msra.mxu0 0.0
    %65 = vmatpush.msra.mxu0 %v48
    %66 = vmatmul.f32.gmra.mxu0 %v35
    %v67 = vpop.f32.mrf.mxu0
    %v68 = vadd.f32 0.0, %v67
    %69 = vmatmul.f32.gmra.mxu0 %v38
    %v70 = vpop.f32.mrf.mxu0
    %v71 = vadd.f32 0.0, %v70
    %72 = vmatmul.f32.gmra.mxu0 %v41
    %v73 = vpop.f32.mrf.mxu0
    %v74 = vadd.f32 0.0, %v73
    %75 = vmatmul.f32.gmra.mxu0 %v44
    %v76 = vpop.f32.mrf.mxu0
    %v77 = vadd.f32 0.0, %v76
    %78 = vdwg.mxu0
    %v79 = vld [vmem:[#allocation2 + $0x8] sm:$0x1]
    %v80 = vld [vmem:[#allocation2 + $0x10] sm:$0x1]
    %vm81 = vcmask 130048
    %v82 = vsel %vm81, %v68, 0.0
    %v83 = vsel %vm81, %v71, 0.0
    %v84 = vadd.f32 %v82, %v83
    %v85 = vsel %vm81, %v74, 0.0
    %v86 = vadd.f32 %v84, %v85
    %v87 = vsel %vm81, %v77, 0.0
    %v88 = vadd.f32 %v86, %v87
    %v89 = vrot.slane %v88, 4
    %v90 = vadd.f32 %v88, %v89
    %v91 = vrot.slane %v90, 2
    %v92 = vadd.f32 %v90, %v91
    %v93 = vrot.slane %v92, 1
    %v94 = vadd.f32 %v92, %v93
    %v95 = vrcp.pop 32.0
    %v96 = vmul.f32 32.0, %v95
    %v97 = vsub.f32 1.0, %v96
    %v98 = vmul.f32 %v95, %v97
    %v99 = vadd.f32 %v95, %v98
    %vm100 = vweird.f32 %v95
    %v101 = vsel %vm100, %v95, %v99
    %v102 = vmul.f32 %v94, %v101
    %v103 = vsub.f32 %v68, %v102
    %v104 = vsub.f32 %v71, %v102
    %v105 = vsub.f32 %v74, %v102
    %v106 = vsub.f32 %v77, %v102
    %v107 = vmul.f32 %v103, %v103
    %v108 = vmul.f32 %v104, %v104
    %v109 = vmul.f32 %v105, %v105
    %v110 = vmul.f32 %v106, %v106
    %v111 = vsel %vm81, %v107, 0.0
    %v112 = vsel %vm81, %v108, 0.0
    %v113 = vadd.f32 %v111, %v112
    %v114 = vsel %vm81, %v109, 0.0
    %v115 = vadd.f32 %v113, %v114
    %v116 = vsel %vm81, %v110, 0.0
    %v117 = vadd.f32 %v115, %v116
    %v118 = vrot.slane %v117, 4
    %v119 = vadd.f32 %v117, %v118
    %v120 = vrot.slane %v119, 2
    %v121 = vadd.f32 %v119, %v120
    %v122 = vrot.slane %v121, 1
    %v123 = vadd.f32 %v121, %v122
    %v124 = vmul.f32 %v123, %v101
    %v125 = vadd.f32 %v124, 1e-05
    %v126 = vrsqrt.pop %v125
    %v127 = vmul.f32 %v126, %v125
    %v128 = vmul.f32 %v127, %v126
    %v129 = vmul.f32 0.5, %v128
    %v130 = vsub.f32 1.5, %v129
    %v131 = vmul.f32 %v126, %v130
    %vm132 = vweird.f32 %v125
    %vm133 = vweird.f32 %v126
    %vm134 = vmor %vm132, %vm133
    %v135 = vsel %vm134, %v126, %v131
    %v136 = vmul.f32 %v103, %v135
    %v137 = vmul.f32 %v104, %v135
    %v138 = vmul.f32 %v105, %v135
    %v139 = vmul.f32 %v106, %v135
    %v140 = vperm.slane %v79, 0
    %v141 = vmul.f32 %v140, %v136
    %v142 = vmul.f32 %v140, %v137
    %v143 = vmul.f32 %v140, %v138
    %v144 = vmul.f32 %v140, %v139
    %v145 = vperm.slane %v80, 0
    %v146 = vadd.f32 %v141, %v145
    %v147 = vadd.f32 %v142, %v145
    %v148 = vadd.f32 %v143, %v145
    %v149 = vadd.f32 %v144, %v145
    %v150 = vmax.f32 %v146, 0.0
    %v151 = vmax.f32 %v147, 0.0
    %v152 = vmax.f32 %v148, 0.0
    %v153 = vmax.f32 %v149, 0.0
    %v154 = vld [vmem:[#allocation2 + $0x18] sm:$0xff]
    %v155 = vld [vmem:[#allocation2 + $0x20] sm:$0xff]
    %v157 = vsel %vm81, %v150, 0
    %v160 = vsel %vm81, %v151, 0
    %v163 = vsel %vm81, %v152, 0
    %v166 = vsel %vm81, %v153, 0
    %168 = vmatpush.msra.mxu0 0.0
    %169 = vmatpush.msra.mxu0 0.0
    %170 = vmatpush.msra.mxu0 0.0
    %171 = vmatpush.msra.mxu0 0.0
    %172 = vmatpush.msra.mxu0 0.0
    %173 = vmatpush.msra.mxu0 0.0
    %174 = vmatpush.msra.mxu0 0.0
    %175 = vmatpush.msra.mxu0 0.0
    %176 = vmatpush.msra.mxu0 0.0
    %177 = vmatpush.msra.mxu0 0.0
    %178 = vmatpush.msra.mxu0 0.0
    %179 = vmatpush.msra.mxu0 0.0
    %180 = vmatpush.msra.mxu0 0.0
    %181 = vmatpush.msra.mxu0 0.0
    %182 = vmatpush.msra.mxu0 %v155
    %183 = vmatpush.msra.mxu0 %v154
    %184 = vmatmul.f32.gmra.mxu0 %v157
    %v185 = vpop.f32.mrf.mxu0
    %v186 = vadd.f32 0.0, %v185
    %187 = vmatmul.f32.gmra.mxu0 %v160
    %v188 = vpop.f32.mrf.mxu0
    %v189 = vadd.f32 0.0, %v188
    %190 = vmatmul.f32.gmra.mxu0 %v163
    %v191 = vpop.f32.mrf.mxu0
    %v192 = vadd.f32 0.0, %v191
    %193 = vmatmul.f32.gmra.mxu0 %v166
    %v194 = vpop.f32.mrf.mxu0
    %v195 = vadd.f32 0.0, %v194
    %196 = vdwg.mxu0
    %v197 = vld [vmem:[#allocation2 + $0x28] sm:$0x1]
    %v198 = vld [vmem:[#allocation2 + $0x30] sm:$0x1]
    %vm199 = vcmask 261120
    %v200 = vsel %vm199, %v186, 0.0
    %v201 = vsel %vm199, %v189, 0.0
    %v202 = vadd.f32 %v200, %v201
    %v203 = vsel %vm199, %v192, 0.0
    %v204 = vadd.f32 %v202, %v203
    %v205 = vsel %vm199, %v195, 0.0
    %v206 = vadd.f32 %v204, %v205
    %v207 = vrot.slane %v206, 4
    %v208 = vadd.f32 %v206, %v207
    %v209 = vrot.slane %v208, 2
    %v210 = vadd.f32 %v208, %v209
    %v211 = vrot.slane %v210, 1
    %v212 = vadd.f32 %v210, %v211
    %v213 = vmul.f32 %v212, %v101
    %v214 = vsub.f32 %v186, %v213
    %v215 = vsub.f32 %v189, %v213
    %v216 = vsub.f32 %v192, %v213
    %v217 = vsub.f32 %v195, %v213
    %v218 = vmul.f32 %v214, %v214
    %v219 = vmul.f32 %v215, %v215
    %v220 = vmul.f32 %v216, %v216
    %v221 = vmul.f32 %v217, %v217
    %v222 = vsel %vm199, %v218, 0.0
    %v223 = vsel %vm199, %v219, 0.0
    %v224 = vadd.f32 %v222, %v223
    %v225 = vsel %vm199, %v220, 0.0
    %v226 = vadd.f32 %v224, %v225
    %v227 = vsel %vm199, %v221, 0.0
    %v228 = vadd.f32 %v226, %v227
    %v229 = vrot.slane %v228, 4
    %v230 = vadd.f32 %v228, %v229
    %v231 = vrot.slane %v230, 2
    %v232 = vadd.f32 %v230, %v231
    %v233 = vrot.slane %v232, 1
    %v234 = vadd.f32 %v232, %v233
    %v235 = vmul.f32 %v234, %v101
    %v236 = vadd.f32 %v235, 1e-05
    %v237 = vrsqrt.pop %v236
    %v238 = vmul.f32 %v237, %v236
    %v239 = vmul.f32 %v238, %v237
    %v240 = vmul.f32 0.5, %v239
    %v241 = vsub.f32 1.5, %v240
    %v242 = vmul.f32 %v237, %v241
    %vm243 = vweird.f32 %v236
    %vm244 = vweird.f32 %v237
    %vm245 = vmor %vm243, %vm244
    %v246 = vsel %vm245, %v237, %v242
    %v247 = vmul.f32 %v214, %v246
    %v248 = vmul.f32 %v215, %v246
    %v249 = vmul.f32 %v216, %v246
    %v250 = vmul.f32 %v217, %v246
    %v251 = vperm.slane %v197, 0
    %v252 = vmul.f32 %v251, %v247
    %v253 = vmul.f32 %v251, %v248
    %v254 = vmul.f32 %v251, %v249
    %v255 = vmul.f32 %v251, %v250
    %v256 = vperm.slane %v198, 0
    %v257 = vadd.f32 %v252, %v256
    %v258 = vadd.f32 %v253, %v256
    %v259 = vadd.f32 %v254, %v256
    %v260 = vadd.f32 %v255, %v256
    %v261 = vmax.f32 %v257, 0.0
    %v262 = vmax.f32 %v258, 0.0
    %v263 = vmax.f32 %v259, 0.0
    %v264 = vmax.f32 %v260, 0.0
    %v265 = vld [vmem:[#allocation2 + $0x38] sm:$0x7]
    %v267 = vsel %vm46, %v265, 0
    %269 = vmatpush.msra.mxu0 0.0
    %270 = vmatpush.msra.mxu0 0.0
    %271 = vmatpush.msra.mxu0 0.0
    %272 = vmatpush.msra.mxu0 0.0
    %273 = vmatpush.msra.mxu0 0.0
    %274 = vmatpush.msra.mxu0 0.0
    %275 = vmatpush.msra.mxu0 0.0
    %276 = vmatpush.msra.mxu0 0.0
    %277 = vmatpush.msra.mxu0 0.0
    %278 = vmatpush.msra.mxu0 0.0
    %279 = vmatpush.msra.mxu0 0.0
    %280 = vmatpush.msra.mxu0 0.0
    %281 = vmatpush.msra.mxu0 0.0
    %282 = vmatpush.msra.mxu0 0.0
    %283 = vmatpush.msra.mxu0 0.0
    %284 = vmatpush.msra.mxu0 %v267
    %285 = vmatmul.f32.gmra.mxu0 %v35
    %v286 = vpop.f32.mrf.mxu0
    %v287 = vadd.f32 0.0, %v286
    %288 = vmatmul.f32.gmra.mxu0 %v38
    %v289 = vpop.f32.mrf.mxu0
    %v290 = vadd.f32 0.0, %v289
    %291 = vmatmul.f32.gmra.mxu0 %v41
    %v292 = vpop.f32.mrf.mxu0
    %v293 = vadd.f32 0.0, %v292
    %294 = vmatmul.f32.gmra.mxu0 %v44
    %v295 = vpop.f32.mrf.mxu0
    %v296 = vadd.f32 0.0, %v295
    %297 = vdwg.mxu0
    %v298 = vld [vmem:[#allocation2 + $0x40] sm:$0x1]
    %v299 = vld [vmem:[#allocation2 + $0x48] sm:$0x1]
    %vm300 = vcmask 31744
    %v301 = vsel %vm300, %v287, 0.0
    %v302 = vsel %vm300, %v290, 0.0
    %v303 = vadd.f32 %v301, %v302
    %v304 = vsel %vm300, %v293, 0.0
    %v305 = vadd.f32 %v303, %v304
    %v306 = vsel %vm300, %v296, 0.0
    %v307 = vadd.f32 %v305, %v306
    %v308 = vrot.slane %v307, 4
    %v309 = vadd.f32 %v307, %v308
    %v310 = vrot.slane %v309, 2
    %v311 = vadd.f32 %v309, %v310
    %v312 = vrot.slane %v311, 1
    %v313 = vadd.f32 %v311, %v312
    %v314 = vmul.f32 %v313, %v101
    %v315 = vsub.f32 %v287, %v314
    %v316 = vsub.f32 %v290, %v314
    %v317 = vsub.f32 %v293, %v314
    %v318 = vsub.f32 %v296, %v314
    %v319 = vmul.f32 %v315, %v315
    %v320 = vmul.f32 %v316, %v316
    %v321 = vmul.f32 %v317, %v317
    %v322 = vmul.f32 %v318, %v318
    %v323 = vsel %vm300, %v319, 0.0
    %v324 = vsel %vm300, %v320, 0.0
    %v325 = vadd.f32 %v323, %v324
    %v326 = vsel %vm300, %v321, 0.0
    %v327 = vadd.f32 %v325, %v326
    %v328 = vsel %vm300, %v322, 0.0
    %v329 = vadd.f32 %v327, %v328
    %v330 = vrot.slane %v329, 4
    %v331 = vadd.f32 %v329, %v330
    %v332 = vrot.slane %v331, 2
    %v333 = vadd.f32 %v331, %v332
    %v334 = vrot.slane %v333, 1
    %v335 = vadd.f32 %v333, %v334
    %v336 = vmul.f32 %v335, %v101
    %v337 = vadd.f32 %v336, 1e-05
    %v338 = vrsqrt.pop %v337
    %v339 = vmul.f32 %v338, %v337
    %v340 = vmul.f32 %v339, %v338
    %v341 = vmul.f32 0.5, %v340
    %v342 = vsub.f32 1.5, %v341
    %v343 = vmul.f32 %v338, %v342
    %vm344 = vweird.f32 %v337
    %vm345 = vweird.f32 %v338
    %vm346 = vmor %vm344, %vm345
    %v347 = vsel %vm346, %v338, %v343
    %v348 = vmul.f32 %v315, %v347
    %v349 = vmul.f32 %v316, %v347
    %v350 = vmul.f32 %v317, %v347
    %v351 = vmul.f32 %v318, %v347
    %v352 = vperm.slane %v298, 0
    %v353 = vmul.f32 %v352, %v348
    %v354 = vmul.f32 %v352, %v349
    %v355 = vmul.f32 %v352, %v350
    %v356 = vmul.f32 %v352, %v351
    %v357 = vperm.slane %v299, 0
    %v358 = vadd.f32 %v353, %v357
    %v359 = vadd.f32 %v354, %v357
    %v360 = vadd.f32 %v355, %v357
    %v361 = vadd.f32 %v356, %v357
    %v362 = vmax.f32 %v358, 0.0
    %v363 = vmax.f32 %v359, 0.0
    %v364 = vmax.f32 %v360, 0.0
    %v365 = vmax.f32 %v361, 0.0
    %v366 = vld [vmem:[#allocation2 + $0x50] sm:$0xf]
    %v368 = vsel %vm300, %v362, 0
    %v371 = vsel %vm300, %v363, 0
    %v374 = vsel %vm300, %v364, 0
    %v377 = vsel %vm300, %v365, 0
    %vm379 = vcmask 1043456
    %v381 = vsel %vm379, %v366, 0
    %383 = vmatpush.msra.mxu0 0.0
    %384 = vmatpush.msra.mxu0 0.0
    %385 = vmatpush.msra.mxu0 0.0
    %386 = vmatpush.msra.mxu0 0.0
    %387 = vmatpush.msra.mxu0 0.0
    %388 = vmatpush.msra.mxu0 0.0
    %389 = vmatpush.msra.mxu0 0.0
    %390 = vmatpush.msra.mxu0 0.0
    %391 = vmatpush.msra.mxu0 0.0
    %392 = vmatpush.msra.mxu0 0.0
    %393 = vmatpush.msra.mxu0 0.0
    %394 = vmatpush.msra.mxu0 0.0
    %395 = vmatpush.msra.mxu0 0.0
    %396 = vmatpush.msra.mxu0 0.0
    %397 = vmatpush.msra.mxu0 0.0
    %398 = vmatpush.msra.mxu0 %v381
    %399 = vmatmul.f32.gmra.mxu0 %v368
    %v400 = vpop.f32.mrf.mxu0
    %v401 = vadd.f32 0.0, %v400
    %402 = vmatmul.f32.gmra.mxu0 %v371
    %v403 = vpop.f32.mrf.mxu0
    %v404 = vadd.f32 0.0, %v403
    %405 = vmatmul.f32.gmra.mxu0 %v374
    %v406 = vpop.f32.mrf.mxu0
    %v407 = vadd.f32 0.0, %v406
    %408 = vmatmul.f32.gmra.mxu0 %v377
    %v409 = vpop.f32.mrf.mxu0
    %v410 = vadd.f32 0.0, %v409
    %411 = vdwg.mxu0
    %v412 = vld [vmem:[#allocation2 + $0x58] sm:$0x1]
    %v413 = vld [vmem:[#allocation2 + $0x60] sm:$0x1]
    %vm414 = vcmask 64512
    %v415 = vsel %vm414, %v401, 0.0
    %v416 = vsel %vm414, %v404, 0.0
    %v417 = vadd.f32 %v415, %v416
    %v418 = vsel %vm414, %v407, 0.0
    %v419 = vadd.f32 %v417, %v418
    %v420 = vsel %vm414, %v410, 0.0
    %v421 = vadd.f32 %v419, %v420
    %v422 = vrot.slane %v421, 4
    %v423 = vadd.f32 %v421, %v422
    %v424 = vrot.slane %v423, 2
    %v425 = vadd.f32 %v423, %v424
    %v426 = vrot.slane %v425, 1
    %v427 = vadd.f32 %v425, %v426
    %v428 = vmul.f32 %v427, %v101
    %v429 = vsub.f32 %v401, %v428
    %v430 = vsub.f32 %v404, %v428
    %v431 = vsub.f32 %v407, %v428
    %v432 = vsub.f32 %v410, %v428
    %v433 = vmul.f32 %v429, %v429
    %v434 = vmul.f32 %v430, %v430
    %v435 = vmul.f32 %v431, %v431
    %v436 = vmul.f32 %v432, %v432
    %v437 = vsel %vm414, %v433, 0.0
    %v438 = vsel %vm414, %v434, 0.0
    %v439 = vadd.f32 %v437, %v438
    %v440 = vsel %vm414, %v435, 0.0
    %v441 = vadd.f32 %v439, %v440
    %v442 = vsel %vm414, %v436, 0.0
    %v443 = vadd.f32 %v441, %v442
    %v444 = vrot.slane %v443, 4
    %v445 = vadd.f32 %v443, %v444
    %v446 = vrot.slane %v445, 2
    %v447 = vadd.f32 %v445, %v446
    %v448 = vrot.slane %v447, 1
    %v449 = vadd.f32 %v447, %v448
    %v450 = vmul.f32 %v449, %v101
    %v451 = vadd.f32 %v450, 1e-05
    %v452 = vrsqrt.pop %v451
    %v453 = vmul.f32 %v452, %v451
    %v454 = vmul.f32 %v453, %v452
    %v455 = vmul.f32 0.5, %v454
    %v456 = vsub.f32 1.5, %v455
    %v457 = vmul.f32 %v452, %v456
    %vm458 = vweird.f32 %v451
    %vm459 = vweird.f32 %v452
    %vm460 = vmor %vm458, %vm459
    %v461 = vsel %vm460, %v452, %v457
    %v462 = vmul.f32 %v429, %v461
    %v463 = vmul.f32 %v430, %v461
    %v464 = vmul.f32 %v431, %v461
    %v465 = vmul.f32 %v432, %v461
    %v466 = vperm.slane %v412, 0
    %v467 = vmul.f32 %v466, %v462
    %v468 = vmul.f32 %v466, %v463
    %v469 = vmul.f32 %v466, %v464
    %v470 = vmul.f32 %v466, %v465
    %v471 = vperm.slane %v413, 0
    %v472 = vadd.f32 %v467, %v471
    %v473 = vadd.f32 %v468, %v471
    %v474 = vadd.f32 %v469, %v471
    %v475 = vadd.f32 %v470, %v471
    %v476 = vmax.f32 %v472, 0.0
    %v477 = vmax.f32 %v473, 0.0
    %v478 = vmax.f32 %v474, 0.0
    %v479 = vmax.f32 %v475, 0.0
    %v480 = vld [vmem:[#allocation2 + $0x68] sm:$0xff]
    %v482 = vsel %vm414, %v476, 0
    %v485 = vsel %vm414, %v477, 0
    %v488 = vsel %vm414, %v478, 0
    %v491 = vsel %vm414, %v479, 0
    %493 = vmatpush.msra.mxu0 0.0
    %494 = vmatpush.msra.mxu0 0.0
    %495 = vmatpush.msra.mxu0 0.0
    %496 = vmatpush.msra.mxu0 0.0
    %497 = vmatpush.msra.mxu0 0.0
    %498 = vmatpush.msra.mxu0 0.0
    %499 = vmatpush.msra.mxu0 0.0
    %500 = vmatpush.msra.mxu0 0.0
    %501 = vmatpush.msra.mxu0 0.0
    %502 = vmatpush.msra.mxu0 0.0
    %503 = vmatpush.msra.mxu0 0.0
    %504 = vmatpush.msra.mxu0 0.0
    %505 = vmatpush.msra.mxu0 0.0
    %506 = vmatpush.msra.mxu0 0.0
    %507 = vmatpush.msra.mxu0 0.0
    %508 = vmatpush.msra.mxu0 %v480
    %509 = vmatmul.f32.gmra.mxu0 %v482
    %v510 = vpop.f32.mrf.mxu0
    %v511 = vadd.f32 0.0, %v510
    %512 = vmatmul.f32.gmra.mxu0 %v485
    %v513 = vpop.f32.mrf.mxu0
    %v514 = vadd.f32 0.0, %v513
    %515 = vmatmul.f32.gmra.mxu0 %v488
    %v516 = vpop.f32.mrf.mxu0
    %v517 = vadd.f32 0.0, %v516
    %518 = vmatmul.f32.gmra.mxu0 %v491
    %v519 = vpop.f32.mrf.mxu0
    %v520 = vadd.f32 0.0, %v519
    %521 = vdwg.mxu0
    %v522 = vld [vmem:[#allocation2 + $0x70] sm:$0x1]
    %v523 = vld [vmem:[#allocation2 + $0x78] sm:$0x1]
    %v524 = vsel %vm81, %v511, 0.0
    %v525 = vsel %vm81, %v514, 0.0
    %v526 = vadd.f32 %v524, %v525
    %v527 = vsel %vm81, %v517, 0.0
    %v528 = vadd.f32 %v526, %v527
    %v529 = vsel %vm81, %v520, 0.0
    %v530 = vadd.f32 %v528, %v529
    %v531 = vrot.slane %v530, 4
    %v532 = vadd.f32 %v530, %v531
    %v533 = vrot.slane %v532, 2
    %v534 = vadd.f32 %v532, %v533
    %v535 = vrot.slane %v534, 1
    %v536 = vadd.f32 %v534, %v535
    %v537 = vmul.f32 %v536, %v101
    %v538 = vsub.f32 %v511, %v537
    %v539 = vsub.f32 %v514, %v537
    %v540 = vsub.f32 %v517, %v537
    %v541 = vsub.f32 %v520, %v537
    %v542 = vmul.f32 %v538, %v538
    %v543 = vmul.f32 %v539, %v539
    %v544 = vmul.f32 %v540, %v540
    %v545 = vmul.f32 %v541, %v541
    %v546 = vsel %vm81, %v542, 0.0
    %v547 = vsel %vm81, %v543, 0.0
    %v548 = vadd.f32 %v546, %v547
    %v549 = vsel %vm81, %v544, 0.0
    %v550 = vadd.f32 %v548, %v549
    %v551 = vsel %vm81, %v545, 0.0
    %v552 = vadd.f32 %v550, %v551
    %v553 = vrot.slane %v552, 4
    %v554 = vadd.f32 %v552, %v553
    %v555 = vrot.slane %v554, 2
    %v556 = vadd.f32 %v554, %v555
    %v557 = vrot.slane %v556, 1
    %v558 = vadd.f32 %v556, %v557
    %v559 = vmul.f32 %v558, %v101
    %v560 = vadd.f32 %v559, 1e-05
    %v561 = vrsqrt.pop %v560
    %v562 = vmul.f32 %v561, %v560
    %v563 = vmul.f32 %v562, %v561
    %v564 = vmul.f32 0.5, %v563
    %v565 = vsub.f32 1.5, %v564
    %v566 = vmul.f32 %v561, %v565
    %vm567 = vweird.f32 %v560
    %vm568 = vweird.f32 %v561
    %vm569 = vmor %vm567, %vm568
    %v570 = vsel %vm569, %v561, %v566
    %v571 = vmul.f32 %v538, %v570
    %v572 = vmul.f32 %v539, %v570
    %v573 = vmul.f32 %v540, %v570
    %v574 = vmul.f32 %v541, %v570
    %v575 = vperm.slane %v522, 0
    %v576 = vmul.f32 %v575, %v571
    %v577 = vmul.f32 %v575, %v572
    %v578 = vmul.f32 %v575, %v573
    %v579 = vmul.f32 %v575, %v574
    %v580 = vperm.slane %v523, 0
    %v581 = vadd.f32 %v576, %v580
    %v582 = vadd.f32 %v577, %v580
    %v583 = vadd.f32 %v578, %v580
    %v584 = vadd.f32 %v579, %v580
    %v585 = vmax.f32 %v581, 0.0
    %v586 = vmax.f32 %v582, 0.0
    %v587 = vmax.f32 %v583, 0.0
    %v588 = vmax.f32 %v584, 0.0
    %589 = vxpose.xlu0.b32.start [1/16] %v585, 128
    %590 = vxpose.xlu0.b32.cont [2/16] %v586, 128
    %591 = vxpose.xlu0.b32.cont [3/16] 0.0, 128
    %592 = vxpose.xlu0.b32.cont [4/16] 0.0, 128
    %593 = vxpose.xlu0.b32.cont [5/16] 0.0, 128
    %594 = vxpose.xlu0.b32.cont [6/16] 0.0, 128
    %595 = vxpose.xlu0.b32.cont [7/16] 0.0, 128
    %596 = vxpose.xlu0.b32.cont [8/16] 0.0, 128
    %597 = vxpose.xlu0.b32.cont [9/16] 0.0, 128
    %598 = vxpose.xlu0.b32.cont [10/16] 0.0, 128
    %599 = vxpose.xlu0.b32.cont [11/16] 0.0, 128
    %600 = vxpose.xlu0.b32.cont [12/16] 0.0, 128
    %601 = vxpose.xlu0.b32.cont [13/16] 0.0, 128
    %602 = vxpose.xlu0.b32.cont [14/16] 0.0, 128
    %603 = vxpose.xlu0.b32.cont [15/16] 0.0, 128
    %604 = vxpose.xlu0.b32.end [16/16] 0.0, 128
    %v605 = vpop.trf.xlu0
    %v606 = vpop.trf.xlu0
    %v607 = vpop.trf.xlu0
    %v608 = vpop.trf.xlu0
    %v609 = vpop.trf.xlu0
    %v610 = vpop.trf.xlu0
    %v611 = vpop.trf.xlu0
    %v612 = vpop.trf.xlu0
    %v613 = vpop.trf.xlu0
    %v614 = vpop.trf.xlu0
    %v615 = vpop.trf.xlu0
    %v616 = vpop.trf.xlu0
    %v617 = vpop.trf.xlu0
    %v618 = vpop.trf.xlu0
    %v619 = vpop.trf.xlu0
    %v620 = vpop.trf.xlu0
    %v622 = vsel %vm81, %v605, 0
    %v625 = vsel %vm81, %v606, 0
    %627 = vmatpush.msra.mxu0 0.0
    %628 = vmatpush.msra.mxu0 0.0
    %629 = vmatpush.msra.mxu0 0.0
    %630 = vmatpush.msra.mxu0 0.0
    %631 = vmatpush.msra.mxu0 0.0
    %632 = vmatpush.msra.mxu0 0.0
    %633 = vmatpush.msra.mxu0 0.0
    %634 = vmatpush.msra.mxu0 0.0
    %635 = vmatpush.msra.mxu0 0.0
    %636 = vmatpush.msra.mxu0 0.0
    %637 = vmatpush.msra.mxu0 0.0
    %638 = vmatpush.msra.mxu0 0.0
    %639 = vmatpush.msra.mxu0 0.0
    %640 = vmatpush.msra.mxu0 0.0
    %641 = vmatpush.msra.mxu0 %v262
    %642 = vmatpush.msra.mxu0 %v261
    %643 = vmatmul.f32.gmra.mxu0 %v622
    %v644 = vpop.f32.mrf.mxu0
    %v645 = vadd.f32 0.0, %v644
    %646 = vmatmul.f32.gmra.mxu0 %v625
    %v647 = vpop.f32.mrf.mxu0
    %v648 = vadd.f32 0.0, %v647
    %649 = vdwg.mxu0
    %650 = vxpose.xlu0.b32.start [1/16] %v587, 128
    %651 = vxpose.xlu0.b32.cont [2/16] %v588, 128
    %652 = vxpose.xlu0.b32.cont [3/16] 0.0, 128
    %653 = vxpose.xlu0.b32.cont [4/16] 0.0, 128
    %654 = vxpose.xlu0.b32.cont [5/16] 0.0, 128
    %655 = vxpose.xlu0.b32.cont [6/16] 0.0, 128
    %656 = vxpose.xlu0.b32.cont [7/16] 0.0, 128
    %657 = vxpose.xlu0.b32.cont [8/16] 0.0, 128
    %658 = vxpose.xlu0.b32.cont [9/16] 0.0, 128
    %659 = vxpose.xlu0.b32.cont [10/16] 0.0, 128
    %660 = vxpose.xlu0.b32.cont [11/16] 0.0, 128
    %661 = vxpose.xlu0.b32.cont [12/16] 0.0, 128
    %662 = vxpose.xlu0.b32.cont [13/16] 0.0, 128
    %663 = vxpose.xlu0.b32.cont [14/16] 0.0, 128
    %664 = vxpose.xlu0.b32.cont [15/16] 0.0, 128
    %665 = vxpose.xlu0.b32.end [16/16] 0.0, 128
    %v666 = vpop.trf.xlu0
    %v667 = vpop.trf.xlu0
    %v668 = vpop.trf.xlu0
    %v669 = vpop.trf.xlu0
    %v670 = vpop.trf.xlu0
    %v671 = vpop.trf.xlu0
    %v672 = vpop.trf.xlu0
    %v673 = vpop.trf.xlu0
    %v674 = vpop.trf.xlu0
    %v675 = vpop.trf.xlu0
    %v676 = vpop.trf.xlu0
    %v677 = vpop.trf.xlu0
    %v678 = vpop.trf.xlu0
    %v679 = vpop.trf.xlu0
    %v680 = vpop.trf.xlu0
    %v681 = vpop.trf.xlu0
    %v683 = vsel %vm81, %v666, 0
    %v686 = vsel %vm81, %v667, 0
    %688 = vmatpush.msra.mxu0 0.0
    %689 = vmatpush.msra.mxu0 0.0
    %690 = vmatpush.msra.mxu0 0.0
    %691 = vmatpush.msra.mxu0 0.0
    %692 = vmatpush.msra.mxu0 0.0
    %693 = vmatpush.msra.mxu0 0.0
    %694 = vmatpush.msra.mxu0 0.0
    %695 = vmatpush.msra.mxu0 0.0
    %696 = vmatpush.msra.mxu0 0.0
    %697 = vmatpush.msra.mxu0 0.0
    %698 = vmatpush.msra.mxu0 0.0
    %699 = vmatpush.msra.mxu0 0.0
    %700 = vmatpush.msra.mxu0 0.0
    %701 = vmatpush.msra.mxu0 0.0
    %702 = vmatpush.msra.mxu0 %v264
    %703 = vmatpush.msra.mxu0 %v263
    %704 = vmatmul.f32.gmra.mxu0 %v683
    %v705 = vpop.f32.mrf.mxu0
    %v706 = vadd.f32 0.0, %v705
    %707 = vmatmul.f32.gmra.mxu0 %v686
    %v708 = vpop.f32.mrf.mxu0
    %v709 = vadd.f32 0.0, %v708
    %710 = vdwg.mxu0
    %v711 = vld [vmem:[#allocation2 + $0x80] sm:$0xff]
    %v712 = vld [vmem:[#allocation2 + $0x88] sm:$0xff]
    %v713 = vld [vmem:[#allocation2 + $0x90] sm:$0xff]
    %v714 = vld [vmem:[#allocation2 + $0x98] sm:$0xff]
    %v715 = vld [vmem:[#allocation2 + $0xa0] sm:$0xff]
    %v716 = vld [vmem:[#allocation2 + $0xa8] sm:$0xff]
    %v717 = vld [vmem:[#allocation2 + $0xb0] sm:$0xff]
    %v718 = vld [vmem:[#allocation2 + $0xb8] sm:$0xff]
    %v721 = vrot.slane %v645, 1
    %vm722 = vcmask 1041409
    %v723 = vsel %vm722, %v706, %v721
    %v724 = vsel %vm199, %v723, 0
    %726 = vmatpush.msra.mxu0 0.0
    %727 = vmatpush.msra.mxu0 0.0
    %728 = vmatpush.msra.mxu0 0.0
    %729 = vmatpush.msra.mxu0 0.0
    %730 = vmatpush.msra.mxu0 0.0
    %731 = vmatpush.msra.mxu0 0.0
    %732 = vmatpush.msra.mxu0 0.0
    %733 = vmatpush.msra.mxu0 0.0
    %734 = vmatpush.msra.mxu0 0.0
    %735 = vmatpush.msra.mxu0 0.0
    %736 = vmatpush.msra.mxu0 0.0
    %737 = vmatpush.msra.mxu0 0.0
    %738 = vmatpush.msra.mxu0 %v718
    %739 = vmatpush.msra.mxu0 %v717
    %740 = vmatpush.msra.mxu0 %v716
    %741 = vmatpush.msra.mxu0 %v715
    %742 = vmatmul.f32.gmra.mxu0 %v724
    %v743 = vpop.f32.mrf.mxu0
    %v744 = vadd.f32 0.0, %v743
    %745 = vdwg.mxu0
    %v746 = vld [vmem:[#allocation2 + $0xc0] sm:$0xff]
    %v747 = vld [vmem:[#allocation2 + $0xc8] sm:$0xff]
    %v748 = vld [vmem:[#allocation2 + $0xd0] sm:$0xff]
    %v749 = vld [vmem:[#allocation2 + $0xd8] sm:$0xff]
    %v750 = vld [vmem:[#allocation2 + $0xe0] sm:$0xff]
    %v751 = vld [vmem:[#allocation2 + $0xe8] sm:$0xff]
    %v752 = vld [vmem:[#allocation2 + $0xf0] sm:$0xff]
    %v753 = vld [vmem:[#allocation2 + $0xf8] sm:$0xff]
    %v754 = vrot.slane %v645, 3
    %v755 = vrot.slane %v706, 2
    %v756 = vsel %vm722, %v755, %v754
    %v757 = vsel %vm199, %v756, 0
    %759 = vmatpush.msra.mxu0 0.0
    %760 = vmatpush.msra.mxu0 0.0
    %761 = vmatpush.msra.mxu0 0.0
    %762 = vmatpush.msra.mxu0 0.0
    %763 = vmatpush.msra.mxu0 0.0
    %764 = vmatpush.msra.mxu0 0.0
    %765 = vmatpush.msra.mxu0 0.0
    %766 = vmatpush.msra.mxu0 0.0
    %767 = vmatpush.msra.mxu0 0.0
    %768 = vmatpush.msra.mxu0 0.0
    %769 = vmatpush.msra.mxu0 0.0
    %770 = vmatpush.msra.mxu0 0.0
    %771 = vmatpush.msra.mxu0 %v753
    %772 = vmatpush.msra.mxu0 %v752
    %773 = vmatpush.msra.mxu0 %v751
    %774 = vmatpush.msra.mxu0 %v750
    %775 = vmatmul.f32.gmra.mxu0 %v757
    %v776 = vpop.f32.mrf.mxu0
    %v777 = vadd.f32 0.0, %v776
    %778 = vdwg.mxu0
    %v779 = vld [vmem:[#allocation2 + $0x100] sm:$0xff]
    %v780 = vld [vmem:[#allocation2 + $0x108] sm:$0xff]
    %v781 = vld [vmem:[#allocation2 + $0x110] sm:$0xff]
    %v782 = vld [vmem:[#allocation2 + $0x118] sm:$0xff]
    %v783 = vld [vmem:[#allocation2 + $0x120] sm:$0xff]
    %v784 = vld [vmem:[#allocation2 + $0x128] sm:$0xff]
    %v785 = vld [vmem:[#allocation2 + $0x130] sm:$0xff]
    %v786 = vld [vmem:[#allocation2 + $0x138] sm:$0xff]
    %v787 = vrot.slane %v645, 5
    %v788 = vrot.slane %v706, 4
    %v789 = vsel %vm722, %v788, %v787
    %v790 = vsel %vm199, %v789, 0
    %792 = vmatpush.msra.mxu0 0.0
    %793 = vmatpush.msra.mxu0 0.0
    %794 = vmatpush.msra.mxu0 0.0
    %795 = vmatpush.msra.mxu0 0.0
    %796 = vmatpush.msra.mxu0 0.0
    %797 = vmatpush.msra.mxu0 0.0
    %798 = vmatpush.msra.mxu0 0.0
    %799 = vmatpush.msra.mxu0 0.0
    %800 = vmatpush.msra.mxu0 0.0
    %801 = vmatpush.msra.mxu0 0.0
    %802 = vmatpush.msra.mxu0 0.0
    %803 = vmatpush.msra.mxu0 0.0
    %804 = vmatpush.msra.mxu0 %v786
    %805 = vmatpush.msra.mxu0 %v785
    %806 = vmatpush.msra.mxu0 %v784
    %807 = vmatpush.msra.mxu0 %v783
    %808 = vmatmul.f32.gmra.mxu0 %v790
    %v809 = vpop.f32.mrf.mxu0
    %v810 = vadd.f32 0.0, %v809
    %811 = vdwg.mxu0
    %v812 = vld [vmem:[#allocation2 + $0x140] sm:$0xff]
    %v813 = vld [vmem:[#allocation2 + $0x148] sm:$0xff]
    %v814 = vld [vmem:[#allocation2 + $0x150] sm:$0xff]
    %v815 = vld [vmem:[#allocation2 + $0x158] sm:$0xff]
    %v816 = vld [vmem:[#allocation2 + $0x160] sm:$0xff]
    %v817 = vld [vmem:[#allocation2 + $0x168] sm:$0xff]
    %v818 = vld [vmem:[#allocation2 + $0x170] sm:$0xff]
    %v819 = vld [vmem:[#allocation2 + $0x178] sm:$0xff]
    %v820 = vrot.slane %v645, 7
    %v821 = vrot.slane %v706, 6
    %v822 = vsel %vm722, %v821, %v820
    %v823 = vsel %vm199, %v822, 0
    %825 = vmatpush.msra.mxu0 0.0
    %826 = vmatpush.msra.mxu0 0.0
    %827 = vmatpush.msra.mxu0 0.0
    %828 = vmatpush.msra.mxu0 0.0
    %829 = vmatpush.msra.mxu0 0.0
    %830 = vmatpush.msra.mxu0 0.0
    %831 = vmatpush.msra.mxu0 0.0
    %832 = vmatpush.msra.mxu0 0.0
    %833 = vmatpush.msra.mxu0 0.0
    %834 = vmatpush.msra.mxu0 0.0
    %835 = vmatpush.msra.mxu0 0.0
    %836 = vmatpush.msra.mxu0 0.0
    %837 = vmatpush.msra.mxu0 %v819
    %838 = vmatpush.msra.mxu0 %v818
    %839 = vmatpush.msra.mxu0 %v817
    %840 = vmatpush.msra.mxu0 %v816
    %841 = vmatmul.f32.gmra.mxu0 %v823
    %v842 = vpop.f32.mrf.mxu0
    %v843 = vadd.f32 0.0, %v842
    %844 = vdwg.mxu0
    %v845 = vld [vmem:[#allocation2 + $0x180] sm:$0xff]
    %v846 = vld [vmem:[#allocation2 + $0x188] sm:$0xff]
    %v847 = vld [vmem:[#allocation2 + $0x190] sm:$0xff]
    %v848 = vld [vmem:[#allocation2 + $0x198] sm:$0xff]
    %v849 = vld [vmem:[#allocation2 + $0x1a0] sm:$0xff]
    %v850 = vld [vmem:[#allocation2 + $0x1a8] sm:$0xff]
    %v851 = vld [vmem:[#allocation2 + $0x1b0] sm:$0xff]
    %v852 = vld [vmem:[#allocation2 + $0x1b8] sm:$0xff]
    %v855 = vrot.slane %v648, 1
    %v856 = vsel %vm722, %v709, %v855
    %v857 = vsel %vm199, %v856, 0
    %859 = vmatpush.msra.mxu0 0.0
    %860 = vmatpush.msra.mxu0 0.0
    %861 = vmatpush.msra.mxu0 0.0
    %862 = vmatpush.msra.mxu0 0.0
    %863 = vmatpush.msra.mxu0 0.0
    %864 = vmatpush.msra.mxu0 0.0
    %865 = vmatpush.msra.mxu0 0.0
    %866 = vmatpush.msra.mxu0 0.0
    %867 = vmatpush.msra.mxu0 0.0
    %868 = vmatpush.msra.mxu0 0.0
    %869 = vmatpush.msra.mxu0 0.0
    %870 = vmatpush.msra.mxu0 0.0
    %871 = vmatpush.msra.mxu0 %v852
    %872 = vmatpush.msra.mxu0 %v851
    %873 = vmatpush.msra.mxu0 %v850
    %874 = vmatpush.msra.mxu0 %v849
    %875 = vmatmul.f32.gmra.mxu0 %v857
    %v876 = vpop.f32.mrf.mxu0
    %v877 = vadd.f32 0.0, %v876
    %878 = vdwg.mxu0
    %v879 = vld [vmem:[#allocation2 + $0x1c0] sm:$0xff]
    %v880 = vld [vmem:[#allocation2 + $0x1c8] sm:$0xff]
    %v881 = vld [vmem:[#allocation2 + $0x1d0] sm:$0xff]
    %v882 = vld [vmem:[#allocation2 + $0x1d8] sm:$0xff]
    %v883 = vld [vmem:[#allocation2 + $0x1e0] sm:$0xff]
    %v884 = vld [vmem:[#allocation2 + $0x1e8] sm:$0xff]
    %v885 = vld [vmem:[#allocation2 + $0x1f0] sm:$0xff]
    %v886 = vld [vmem:[#allocation2 + $0x1f8] sm:$0xff]
    %v887 = vrot.slane %v648, 3
    %v888 = vrot.slane %v709, 2
    %v889 = vsel %vm722, %v888, %v887
    %v890 = vsel %vm199, %v889, 0
    %892 = vmatpush.msra.mxu0 0.0
    %893 = vmatpush.msra.mxu0 0.0
    %894 = vmatpush.msra.mxu0 0.0
    %895 = vmatpush.msra.mxu0 0.0
    %896 = vmatpush.msra.mxu0 0.0
    %897 = vmatpush.msra.mxu0 0.0
    %898 = vmatpush.msra.mxu0 0.0
    %899 = vmatpush.msra.mxu0 0.0
    %900 = vmatpush.msra.mxu0 0.0
    %901 = vmatpush.msra.mxu0 0.0
    %902 = vmatpush.msra.mxu0 0.0
    %903 = vmatpush.msra.mxu0 0.0
    %904 = vmatpush.msra.mxu0 %v886
    %905 = vmatpush.msra.mxu0 %v885
    %906 = vmatpush.msra.mxu0 %v884
    %907 = vmatpush.msra.mxu0 %v883
    %908 = vmatmul.f32.gmra.mxu0 %v890
    %v909 = vpop.f32.mrf.mxu0
    %v910 = vadd.f32 0.0, %v909
    %911 = vdwg.mxu0
    %v912 = vld [vmem:[#allocation2 + $0x200] sm:$0xff]
    %v913 = vld [vmem:[#allocation2 + $0x208] sm:$0xff]
    %v914 = vld [vmem:[#allocation2 + $0x210] sm:$0xff]
    %v915 = vld [vmem:[#allocation2 + $0x218] sm:$0xff]
    %v916 = vld [vmem:[#allocation2 + $0x220] sm:$0xff]
    %v917 = vld [vmem:[#allocation2 + $0x228] sm:$0xff]
    %v918 = vld [vmem:[#allocation2 + $0x230] sm:$0xff]
    %v919 = vld [vmem:[#allocation2 + $0x238] sm:$0xff]
    %v920 = vrot.slane %v648, 5
    %v921 = vrot.slane %v709, 4
    %v922 = vsel %vm722, %v921, %v920
    %v923 = vsel %vm199, %v922, 0
    %925 = vmatpush.msra.mxu0 0.0
    %926 = vmatpush.msra.mxu0 0.0
    %927 = vmatpush.msra.mxu0 0.0
    %928 = vmatpush.msra.mxu0 0.0
    %929 = vmatpush.msra.mxu0 0.0
    %930 = vmatpush.msra.mxu0 0.0
    %931 = vmatpush.msra.mxu0 0.0
    %932 = vmatpush.msra.mxu0 0.0
    %933 = vmatpush.msra.mxu0 0.0
    %934 = vmatpush.msra.mxu0 0.0
    %935 = vmatpush.msra.mxu0 0.0
    %936 = vmatpush.msra.mxu0 0.0
    %937 = vmatpush.msra.mxu0 %v919
    %938 = vmatpush.msra.mxu0 %v918
    %939 = vmatpush.msra.mxu0 %v917
    %940 = vmatpush.msra.mxu0 %v916
    %941 = vmatmul.f32.gmra.mxu0 %v923
    %v942 = vpop.f32.mrf.mxu0
    %v943 = vadd.f32 0.0, %v942
    %944 = vdwg.mxu0
    %v945 = vld [vmem:[#allocation2 + $0x240] sm:$0xff]
    %v946 = vld [vmem:[#allocation2 + $0x248] sm:$0xff]
    %v947 = vld [vmem:[#allocation2 + $0x250] sm:$0xff]
    %v948 = vld [vmem:[#allocation2 + $0x258] sm:$0xff]
    %v949 = vld [vmem:[#allocation2 + $0x260] sm:$0xff]
    %v950 = vld [vmem:[#allocation2 + $0x268] sm:$0xff]
    %v951 = vld [vmem:[#allocation2 + $0x270] sm:$0xff]
    %v952 = vld [vmem:[#allocation2 + $0x278] sm:$0xff]
    %v953 = vrot.slane %v648, 7
    %v954 = vrot.slane %v709, 6
    %v955 = vsel %vm722, %v954, %v953
    %v956 = vsel %vm199, %v955, 0
    %958 = vmatpush.msra.mxu0 0.0
    %959 = vmatpush.msra.mxu0 0.0
    %960 = vmatpush.msra.mxu0 0.0
    %961 = vmatpush.msra.mxu0 0.0
    %962 = vmatpush.msra.mxu0 0.0
    %963 = vmatpush.msra.mxu0 0.0
    %964 = vmatpush.msra.mxu0 0.0
    %965 = vmatpush.msra.mxu0 0.0
    %966 = vmatpush.msra.mxu0 0.0
    %967 = vmatpush.msra.mxu0 0.0
    %968 = vmatpush.msra.mxu0 0.0
    %969 = vmatpush.msra.mxu0 0.0
    %970 = vmatpush.msra.mxu0 %v952
    %971 = vmatpush.msra.mxu0 %v951
    %972 = vmatpush.msra.mxu0 %v950
    %973 = vmatpush.msra.mxu0 %v949
    %974 = vmatmul.f32.gmra.mxu0 %v956
    %v975 = vpop.f32.mrf.mxu0
    %v976 = vadd.f32 0.0, %v975
    %977 = vdwg.mxu0
    %v978 = vrot.slane %v706, 7
    %v979 = vsel %vm722, %v978, %v645
    %v980 = vsel %vm199, %v979, 0
    %982 = vmatpush.msra.mxu0 0.0
    %983 = vmatpush.msra.mxu0 0.0
    %984 = vmatpush.msra.mxu0 0.0
    %985 = vmatpush.msra.mxu0 0.0
    %986 = vmatpush.msra.mxu0 0.0
    %987 = vmatpush.msra.mxu0 0.0
    %988 = vmatpush.msra.mxu0 0.0
    %989 = vmatpush.msra.mxu0 0.0
    %990 = vmatpush.msra.mxu0 0.0
    %991 = vmatpush.msra.mxu0 0.0
    %992 = vmatpush.msra.mxu0 0.0
    %993 = vmatpush.msra.mxu0 0.0
    %994 = vmatpush.msra.mxu0 %v714
    %995 = vmatpush.msra.mxu0 %v713
    %996 = vmatpush.msra.mxu0 %v712
    %997 = vmatpush.msra.mxu0 %v711
    %998 = vmatmul.f32.gmra.mxu0 %v980
    %v999 = vpop.f32.mrf.mxu0
    %v1000 = vadd.f32 %v744, %v999
    %1001 = vdwg.mxu0
    %v1002 = vrot.slane %v645, 2
    %v1003 = vrot.slane %v706, 1
    %v1004 = vsel %vm722, %v1003, %v1002
    %v1005 = vsel %vm199, %v1004, 0
    %1007 = vmatpush.msra.mxu0 0.0
    %1008 = vmatpush.msra.mxu0 0.0
    %1009 = vmatpush.msra.mxu0 0.0
    %1010 = vmatpush.msra.mxu0 0.0
    %1011 = vmatpush.msra.mxu0 0.0
    %1012 = vmatpush.msra.mxu0 0.0
    %1013 = vmatpush.msra.mxu0 0.0
    %1014 = vmatpush.msra.mxu0 0.0
    %1015 = vmatpush.msra.mxu0 0.0
    %1016 = vmatpush.msra.mxu0 0.0
    %1017 = vmatpush.msra.mxu0 0.0
    %1018 = vmatpush.msra.mxu0 0.0
    %1019 = vmatpush.msra.mxu0 %v749
    %1020 = vmatpush.msra.mxu0 %v748
    %1021 = vmatpush.msra.mxu0 %v747
    %1022 = vmatpush.msra.mxu0 %v746
    %1023 = vmatmul.f32.gmra.mxu0 %v1005
    %v1024 = vpop.f32.mrf.mxu0
    %v1025 = vadd.f32 %v777, %v1024
    %1026 = vdwg.mxu0
    %v1027 = vrot.slane %v645, 4
    %v1028 = vrot.slane %v706, 3
    %v1029 = vsel %vm722, %v1028, %v1027
    %v1030 = vsel %vm199, %v1029, 0
    %1032 = vmatpush.msra.mxu0 0.0
    %1033 = vmatpush.msra.mxu0 0.0
    %1034 = vmatpush.msra.mxu0 0.0
    %1035 = vmatpush.msra.mxu0 0.0
    %1036 = vmatpush.msra.mxu0 0.0
    %1037 = vmatpush.msra.mxu0 0.0
    %1038 = vmatpush.msra.mxu0 0.0
    %1039 = vmatpush.msra.mxu0 0.0
    %1040 = vmatpush.msra.mxu0 0.0
    %1041 = vmatpush.msra.mxu0 0.0
    %1042 = vmatpush.msra.mxu0 0.0
    %1043 = vmatpush.msra.mxu0 0.0
    %1044 = vmatpush.msra.mxu0 %v782
    %1045 = vmatpush.msra.mxu0 %v781
    %1046 = vmatpush.msra.mxu0 %v780
    %1047 = vmatpush.msra.mxu0 %v779
    %1048 = vmatmul.f32.gmra.mxu0 %v1030
    %v1049 = vpop.f32.mrf.mxu0
    %v1050 = vadd.f32 %v810, %v1049
    %1051 = vdwg.mxu0
    %v1052 = vrot.slane %v645, 6
    %v1053 = vrot.slane %v706, 5
    %v1054 = vsel %vm722, %v1053, %v1052
    %v1055 = vsel %vm199, %v1054, 0
    %1057 = vmatpush.msra.mxu0 0.0
    %1058 = vmatpush.msra.mxu0 0.0
    %1059 = vmatpush.msra.mxu0 0.0
    %1060 = vmatpush.msra.mxu0 0.0
    %1061 = vmatpush.msra.mxu0 0.0
    %1062 = vmatpush.msra.mxu0 0.0
    %1063 = vmatpush.msra.mxu0 0.0
    %1064 = vmatpush.msra.mxu0 0.0
    %1065 = vmatpush.msra.mxu0 0.0
    %1066 = vmatpush.msra.mxu0 0.0
    %1067 = vmatpush.msra.mxu0 0.0
    %1068 = vmatpush.msra.mxu0 0.0
    %1069 = vmatpush.msra.mxu0 %v815
    %1070 = vmatpush.msra.mxu0 %v814
    %1071 = vmatpush.msra.mxu0 %v813
    %1072 = vmatpush.msra.mxu0 %v812
    %1073 = vmatmul.f32.gmra.mxu0 %v1055
    %v1074 = vpop.f32.mrf.mxu0
    %v1075 = vadd.f32 %v843, %v1074
    %1076 = vdwg.mxu0
    %v1077 = vrot.slane %v709, 7
    %v1078 = vsel %vm722, %v1077, %v648
    %v1079 = vsel %vm199, %v1078, 0
    %1081 = vmatpush.msra.mxu0 0.0
    %1082 = vmatpush.msra.mxu0 0.0
    %1083 = vmatpush.msra.mxu0 0.0
    %1084 = vmatpush.msra.mxu0 0.0
    %1085 = vmatpush.msra.mxu0 0.0
    %1086 = vmatpush.msra.mxu0 0.0
    %1087 = vmatpush.msra.mxu0 0.0
    %1088 = vmatpush.msra.mxu0 0.0
    %1089 = vmatpush.msra.mxu0 0.0
    %1090 = vmatpush.msra.mxu0 0.0
    %1091 = vmatpush.msra.mxu0 0.0
    %1092 = vmatpush.msra.mxu0 0.0
    %1093 = vmatpush.msra.mxu0 %v848
    %1094 = vmatpush.msra.mxu0 %v847
    %1095 = vmatpush.msra.mxu0 %v846
    %1096 = vmatpush.msra.mxu0 %v845
    %1097 = vmatmul.f32.gmra.mxu0 %v1079
    %v1098 = vpop.f32.mrf.mxu0
    %v1099 = vadd.f32 %v877, %v1098
    %1100 = vdwg.mxu0
    %v1101 = vrot.slane %v648, 2
    %v1102 = vrot.slane %v709, 1
    %v1103 = vsel %vm722, %v1102, %v1101
    %v1104 = vsel %vm199, %v1103, 0
    %1106 = vmatpush.msra.mxu0 0.0
    %1107 = vmatpush.msra.mxu0 0.0
    %1108 = vmatpush.msra.mxu0 0.0
    %1109 = vmatpush.msra.mxu0 0.0
    %1110 = vmatpush.msra.mxu0 0.0
    %1111 = vmatpush.msra.mxu0 0.0
    %1112 = vmatpush.msra.mxu0 0.0
    %1113 = vmatpush.msra.mxu0 0.0
    %1114 = vmatpush.msra.mxu0 0.0
    %1115 = vmatpush.msra.mxu0 0.0
    %1116 = vmatpush.msra.mxu0 0.0
    %1117 = vmatpush.msra.mxu0 0.0
    %1118 = vmatpush.msra.mxu0 %v882
    %1119 = vmatpush.msra.mxu0 %v881
    %1120 = vmatpush.msra.mxu0 %v880
    %1121 = vmatpush.msra.mxu0 %v879
    %1122 = vmatmul.f32.gmra.mxu0 %v1104
    %v1123 = vpop.f32.mrf.mxu0
    %v1124 = vadd.f32 %v910, %v1123
    %1125 = vdwg.mxu0
    %v1126 = vrot.slane %v648, 4
    %v1127 = vrot.slane %v709, 3
    %v1128 = vsel %vm722, %v1127, %v1126
    %v1129 = vsel %vm199, %v1128, 0
    %1131 = vmatpush.msra.mxu0 0.0
    %1132 = vmatpush.msra.mxu0 0.0
    %1133 = vmatpush.msra.mxu0 0.0
    %1134 = vmatpush.msra.mxu0 0.0
    %1135 = vmatpush.msra.mxu0 0.0
    %1136 = vmatpush.msra.mxu0 0.0
    %1137 = vmatpush.msra.mxu0 0.0
    %1138 = vmatpush.msra.mxu0 0.0
    %1139 = vmatpush.msra.mxu0 0.0
    %1140 = vmatpush.msra.mxu0 0.0
    %1141 = vmatpush.msra.mxu0 0.0
    %1142 = vmatpush.msra.mxu0 0.0
    %1143 = vmatpush.msra.mxu0 %v915
    %1144 = vmatpush.msra.mxu0 %v914
    %1145 = vmatpush.msra.mxu0 %v913
    %1146 = vmatpush.msra.mxu0 %v912
    %1147 = vmatmul.f32.gmra.mxu0 %v1129
    %v1148 = vpop.f32.mrf.mxu0
    %v1149 = vadd.f32 %v943, %v1148
    %1150 = vdwg.mxu0
    %v1151 = vrot.slane %v648, 6
    %v1152 = vrot.slane %v709, 5
    %v1153 = vsel %vm722, %v1152, %v1151
    %v1154 = vsel %vm199, %v1153, 0
    %1156 = vmatpush.msra.mxu0 0.0
    %1157 = vmatpush.msra.mxu0 0.0
    %1158 = vmatpush.msra.mxu0 0.0
    %1159 = vmatpush.msra.mxu0 0.0
    %1160 = vmatpush.msra.mxu0 0.0
    %1161 = vmatpush.msra.mxu0 0.0
    %1162 = vmatpush.msra.mxu0 0.0
    %1163 = vmatpush.msra.mxu0 0.0
    %1164 = vmatpush.msra.mxu0 0.0
    %1165 = vmatpush.msra.mxu0 0.0
    %1166 = vmatpush.msra.mxu0 0.0
    %1167 = vmatpush.msra.mxu0 0.0
    %1168 = vmatpush.msra.mxu0 %v948
    %1169 = vmatpush.msra.mxu0 %v947
    %1170 = vmatpush.msra.mxu0 %v946
    %1171 = vmatpush.msra.mxu0 %v945
    %1172 = vmatmul.f32.gmra.mxu0 %v1154
    %v1173 = vpop.f32.mrf.mxu0
    %v1174 = vadd.f32 %v976, %v1173
    %1175 = vdwg.mxu0
    %v1176 = vadd.f32 %v1000, %v1025
    %v1177 = vadd.f32 %v1050, %v1075
    %v1178 = vadd.f32 %v1099, %v1124
    %v1179 = vadd.f32 %v1149, %v1174
    %v1180 = vadd.f32 %v1176, %v1177
    %v1181 = vadd.f32 %v1178, %v1179
    %v1182 = vadd.f32 %v1180, %v1181
    %v1183 = vld [vmem:[#allocation2 + $0x280] sm:$0x1]
    %v1184 = vld [vmem:[#allocation2 + $0x288] sm:$0x1]
    %vm1185 = vcmask 254976
    %v1186 = vsel %vm1185, %v1182, 0.0
    %v1187 = vrot.slane %v1186, 4
    %v1188 = vadd.f32 %v1186, %v1187
    %v1189 = vrot.slane %v1188, 2
    %v1190 = vadd.f32 %v1188, %v1189
    %v1191 = vrot.slane %v1190, 1
    %v1192 = vadd.f32 %v1190, %v1191
    %v1193 = vrcp.pop 2.0
    %v1194 = vmul.f32 2.0, %v1193
    %v1195 = vsub.f32 1.0, %v1194
    %v1196 = vmul.f32 %v1193, %v1195
    %v1197 = vadd.f32 %v1193, %v1196
    %vm1198 = vweird.f32 %v1193
    %v1199 = vsel %vm1198, %v1193, %v1197
    %v1200 = vmul.f32 %v1192, %v1199
    %v1201 = vsub.f32 %v1182, %v1200
    %v1202 = vmul.f32 %v1201, %v1201
    %v1203 = vsel %vm1185, %v1202, 0.0
    %v1204 = vrot.slane %v1203, 4
    %v1205 = vadd.f32 %v1203, %v1204
    %v1206 = vrot.slane %v1205, 2
    %v1207 = vadd.f32 %v1205, %v1206
    %v1208 = vrot.slane %v1207, 1
    %v1209 = vadd.f32 %v1207, %v1208
    %v1210 = vmul.f32 %v1209, %v1199
    %v1211 = vadd.f32 %v1210, 1e-05
    %v1212 = vrsqrt.pop %v1211
    %v1213 = vmul.f32 %v1212, %v1211
    %v1214 = vmul.f32 %v1213, %v1212
    %v1215 = vmul.f32 0.5, %v1214
    %v1216 = vsub.f32 1.5, %v1215
    %v1217 = vmul.f32 %v1212, %v1216
    %vm1218 = vweird.f32 %v1211
    %vm1219 = vweird.f32 %v1212
    %vm1220 = vmor %vm1218, %vm1219
    %v1221 = vsel %vm1220, %v1212, %v1217
    %v1222 = vmul.f32 %v1201, %v1221
    %v1223 = vperm.slane %v1183, 0
    %v1224 = vmul.f32 %v1223, %v1222
    %v1225 = vperm.slane %v1184, 0
    %v1226 = vadd.f32 %v1224, %v1225
    %v1227 = vmax.f32 %v1226, 0.0
    %v1228 = vsel %vm33, %v28, 0.0
    %v1229 = vsel %vm33, %v29, 0.0
    %v1230 = vadd.f32 %v1228, %v1229
    %v1231 = vrot.slane %v1230, 4
    %v1232 = vadd.f32 %v1230, %v1231
    %v1233 = vrot.slane %v1232, 2
    %v1234 = vadd.f32 %v1232, %v1233
    %v1235 = vrot.slane %v1234, 1
    %v1236 = vadd.f32 %v1234, %v1235
    %v1237 = vsel %vm33, %v30, 0.0
    %v1238 = vsel %vm33, %v31, 0.0
    %v1239 = vadd.f32 %v1237, %v1238
    %v1240 = vrot.slane %v1239, 4
    %v1241 = vadd.f32 %v1239, %v1240
    %v1242 = vrot.slane %v1241, 2
    %v1243 = vadd.f32 %v1241, %v1242
    %v1244 = vrot.slane %v1243, 1
    %v1245 = vadd.f32 %v1243, %v1244
    %v1246 = vrcp.pop 16.0
    %v1247 = vmul.f32 16.0, %v1246
    %v1248 = vsub.f32 1.0, %v1247
    %v1249 = vmul.f32 %v1246, %v1248
    %v1250 = vadd.f32 %v1246, %v1249
    %vm1251 = vweird.f32 %v1246
    %v1252 = vsel %vm1251, %v1246, %v1250
    %v1253 = vmul.f32 %v1236, %v1252
    %v1254 = vmul.f32 %v1245, %v1252
    %v1255 = vlaneseq
    %v1256 = vshrl.u32 %v1255, 7
    %v1257 = vadd.s32 %v1256, 8
    %v1258 = vadd.s32 %v1256, 16
    %v1259 = vadd.s32 %v1256, 24
    %v1260 = vlaneseq
    %v1261 = vand.u32 %v1260, 127
    %vm1262 = vcmp.eq.s32.totalorder %v1261, %v1256
    %vm1263 = vcmp.eq.s32.totalorder %v1261, %v1257
    %vm1264 = vcmp.eq.s32.totalorder %v1261, %v1258
    %vm1265 = vcmp.eq.s32.totalorder %v1261, %v1259
    %v1266 = vsel %vm1262, 1.0, 0.0
    %v1267 = vsel %vm1263, 1.0, 0.0
    %v1268 = vsel %vm1264, 1.0, 0.0
    %v1269 = vsel %vm1265, 1.0, 0.0
    %v1270 = vadd.s32 %v1256, 120
    %vm1271 = vcmp.eq.s32.totalorder %v1261, %v1270
    %v1272 = vsel %vm1271, 1.0, 0.0
    %v1275 = vsel %vm722, %v1254, %v1253
    %v1276 = vsel %vm33, %v1275, 0
    %v1279 = vsel %vm46, %v1272, 0
    %1281 = vmatpush.msra.mxu0 0.0
    %1282 = vmatpush.msra.mxu0 0.0
    %1283 = vmatpush.msra.mxu0 0.0
    %1284 = vmatpush.msra.mxu0 0.0
    %1285 = vmatpush.msra.mxu0 0.0
    %1286 = vmatpush.msra.mxu0 0.0
    %1287 = vmatpush.msra.mxu0 0.0
    %1288 = vmatpush.msra.mxu0 0.0
    %1289 = vmatpush.msra.mxu0 0.0
    %1290 = vmatpush.msra.mxu0 0.0
    %1291 = vmatpush.msra.mxu0 0.0
    %1292 = vmatpush.msra.mxu0 0.0
    %1293 = vmatpush.msra.mxu0 0.0
    %1294 = vmatpush.msra.mxu0 0.0
    %1295 = vmatpush.msra.mxu0 0.0
    %1296 = vmatpush.msra.mxu0 %v1279
    %1297 = vmatmul.f32.gmra.mxu0 %v1276
    %v1298 = vpop.f32.mrf.mxu0
    %v1299 = vadd.f32 0.0, %v1298
    %1300 = vdwg.mxu0
    %v1302 = vsel %vm199, %v1227, 0
    %1304 = vmatpush.msra.mxu0 0.0
    %1305 = vmatpush.msra.mxu0 0.0
    %1306 = vmatpush.msra.mxu0 0.0
    %1307 = vmatpush.msra.mxu0 0.0
    %1308 = vmatpush.msra.mxu0 0.0
    %1309 = vmatpush.msra.mxu0 0.0
    %1310 = vmatpush.msra.mxu0 0.0
    %1311 = vmatpush.msra.mxu0 0.0
    %1312 = vmatpush.msra.mxu0 0.0
    %1313 = vmatpush.msra.mxu0 0.0
    %1314 = vmatpush.msra.mxu0 0.0
    %1315 = vmatpush.msra.mxu0 0.0
    %1316 = vmatpush.msra.mxu0 %v1269
    %1317 = vmatpush.msra.mxu0 %v1268
    %1318 = vmatpush.msra.mxu0 %v1267
    %1319 = vmatpush.msra.mxu0 %v1266
    %1320 = vmatmul.f32.gmra.mxu0 %v1302
    %v1321 = vpop.f32.mrf.mxu0
    %v1322 = vadd.f32 %v1299, %v1321
    %1323 = vdwg.mxu0
    %1324 = vst [vmem:[#allocation5] sm:$0x3] %v1322
    // Predicated region
    $region14: #{tpu_custom_call.1} parent=1 // pred_check
      _
    $region15: #{tpu_custom_call.1} parent=1 // pred_check_branch
      %1326 = sbr.rel (0) target = $region17
    $region16: #{tpu_custom_call.1} parent=1 // pred_region
      %1328 = vsyncadd [#allocation4], 0
      %s1330 = sshll.u32 [#allocation5], 4
      %s1331 = int_to_ptr.vmem [resolvable:$true] %s1330
      %s1332 = sshll.u32 %s2, 4
      %s1333 = int_to_ptr.hbm [resolvable:$true] %s1332
      %1335 = dma.vmem_to_hbm [thread:$0]  %s1331, 32, %s1333, [#allocation4]
    $region17: #{tpu_custom_call.1} parent=1 // pred_fallthru
      _
    // Predicated region
    $region18: #{tpu_custom_call.1} parent=1 // pred_check
      _
    $region19: #{tpu_custom_call.1} parent=1 // pred_check_branch
      %1337 = sbr.rel (0) target = $region21
    $region20: #{tpu_custom_call.1} parent=1 // pred_region
      %1339 = dma.done [#allocation4], 32
    $region21: #{tpu_custom_call.1} parent=1 // pred_fallthru
      _
    %1340 = vsyncpa [#allocation3], 1
    %1341 = vsyncpa [#allocation4], 1

</llo_original>
